<compile_context>
chip_gen: v6e
topology: v6e:2x2x1
jax: 0.10.0
libtpu: 0.0.40
codegen_flags: <defaults>
</compile_context>

<pallas_src>
import functools

import jax
import jax.numpy as jnp
from jax.experimental import pallas as pl
from jax.experimental.pallas import tpu as pltpu

NUM_LAYERS = 2


def _reorder_ifog(x, hidden):
    """Permute packed-gate last axis from torch order (i,f,g,o) to (i,f,o,g)."""
    return jnp.concatenate(
        [x[..., 0 * hidden:2 * hidden],
         x[..., 3 * hidden:4 * hidden],
         x[..., 2 * hidden:3 * hidden]], axis=-1)


def lstm_chunk_kernel(z2_ref, gx_ref, w0h_ref, w1_ref, b1_ref, out_ref,
                      h0_sc, c0_sc, h1_sc, c1_sc, *, chunk, hidden):
    t = pl.program_id(0)
    H = hidden
    bsz = h0_sc.shape[0]

    # First grid step: h0 = zeros, c0 = z2 repeated over both layers.
    @pl.when(t == 0)
    def _():
        c_init = z2_ref[0].astype(jnp.float32)
        h0_sc[...] = jnp.zeros_like(h0_sc)
        h1_sc[...] = jnp.zeros_like(h1_sc)
        c0_sc[...] = c_init
        c1_sc[...] = c_init

    # Loop-invariant loads / broadcasts, hoisted out of the time loop.
    w0h = w0h_ref[...]                                        # (H, 4H)  bf16
    w1 = w1_ref[...]                                          # (2H, 4H) bf16
    b1 = jnp.broadcast_to(b1_ref[...].astype(jnp.float32), (bsz, 4 * H))

    def activate(gates, c_prev):
        # packed gate order is (i, f, o, g)
        sig = jax.nn.sigmoid(gates[:, :3 * H])                # one EUP slab
        g = jnp.tanh(gates[:, 3 * H:])
        i = sig[:, 0 * H:1 * H]
        f = sig[:, 1 * H:2 * H]
        o = sig[:, 2 * H:3 * H]
        c_new = f * c_prev + i * g
        h_new = o * jnp.tanh(c_new)
        return h_new, c_new

    def step(s, carry):
        # Layer 0: x-projection (+bias) precomputed; only the recurrent matmul here.
        gx = gx_ref[s]                                        # (B, 4H) f32
        g0 = gx + jnp.dot(h0_sc[...].astype(w0h.dtype), w0h,
                          preferred_element_type=jnp.float32)
        h0_new, c0_new = activate(g0, c0_sc[...])
        h0_sc[...] = h0_new
        c0_sc[...] = c0_new

        # Layer 1: single fused matmul against [W_ih1; W_hh1].
        xh = jnp.concatenate([h0_new, h1_sc[...]], axis=-1).astype(w1.dtype)
        g1 = jnp.dot(xh, w1, preferred_element_type=jnp.float32) + b1
        h1_new, c1_new = activate(g1, c1_sc[...])
        h1_sc[...] = h1_new
        c1_sc[...] = c1_new

        out_ref[s] = h1_new.astype(out_ref.dtype)             # top-layer h_t
        return carry

    jax.lax.fori_loop(0, chunk, step, 0, unroll=True)


def lstm_translator_forward(z1_seq, z2, params, *, chunk=8):
    """z1_seq: (T, B, H), z2: (1, B, H) -> (T, B, H). Matches LSTMTranslatorNet."""
    T, B, H = z1_seq.shape
    w0x, w0h = params["w0x"], params["w0h"]
    w1, b0, b1 = params["w1"], params["b0"], params["b1"]

    # Pad batch to the f32 sublane width (8) and T to a multiple of the chunk.
    Bp = ((B + 7) // 8) * 8
    Tc = min(chunk, T)
    Tp = ((T + Tc - 1) // Tc) * Tc

    z1p = jnp.zeros((Tp, Bp, H), z1_seq.dtype).at[:T, :B].set(z1_seq)
    z2p = jnp.zeros((1, Bp, H), z2.dtype).at[:, :B].set(z2)

    # Hoisted layer-0 input projection over all timesteps (one big MXU matmul),
    # with the layer-0 bias folded in. Plain XLA; near-peak-shaped.
    gx = (jnp.dot(z1p.reshape(Tp * Bp, H).astype(jnp.bfloat16), w0x,
                  preferred_element_type=jnp.float32)
          + b0).reshape(Tp, Bp, 4 * H)

    grid_spec = pltpu.PrefetchScalarGridSpec(
        num_scalar_prefetch=0,
        grid=(Tp // Tc,),
        in_specs=[
            pl.BlockSpec((1, Bp, H), lambda t: (0, 0, 0)),       # z2 (cell init)
            pl.BlockSpec((Tc, Bp, 4 * H), lambda t: (t, 0, 0)),  # precomputed x-gates
            pl.BlockSpec((H, 4 * H), lambda t: (0, 0)),          # W_hh layer 0 (bf16)
            pl.BlockSpec((2 * H, 4 * H), lambda t: (0, 0)),      # [W_ih;W_hh] layer 1
            pl.BlockSpec((1, 4 * H), lambda t: (0, 0)),          # bias layer 1
        ],
        out_specs=pl.BlockSpec((Tc, Bp, H), lambda t: (t, 0, 0)),
        scratch_shapes=[pltpu.VMEM((Bp, H), jnp.float32)] * 4,   # h0, c0, h1, c1
    )

    out = pl.pallas_call(
        functools.partial(lstm_chunk_kernel, chunk=Tc, hidden=H),
        out_shape=jax.ShapeDtypeStruct((Tp, Bp, H), z1_seq.dtype),
        grid_spec=grid_spec,
        compiler_params=pltpu.CompilerParams(
            dimension_semantics=("arbitrary",)),
    )(z2p, gx, w0h, w1, b1)

    return out[:T, :B, :]


def init_raw_params(key, hidden_dim, num_layers=NUM_LAYERS):
    """Deterministic init mirroring torch.nn.LSTM parameter shapes (torch gate order)."""
    H = hidden_dim
    bound = 1.0 / float(H) ** 0.5
    w_ih, w_hh, b_ih, b_hh = [], [], [], []
    for l in range(num_layers):
        k = jax.random.fold_in(key, l)
        k1, k2, k3, k4 = jax.random.split(k, 4)
        w_ih.append(jax.random.uniform(k1, (4 * H, H), jnp.float32, -bound, bound))
        w_hh.append(jax.random.uniform(k2, (4 * H, H), jnp.float32, -bound, bound))
        b_ih.append(jax.random.uniform(k3, (4 * H,), jnp.float32, -bound, bound))
        b_hh.append(jax.random.uniform(k4, (4 * H,), jnp.float32, -bound, bound))
    return {"w_ih": jnp.stack(w_ih), "w_hh": jnp.stack(w_hh),
            "b_ih": jnp.stack(b_ih), "b_hh": jnp.stack(b_hh)}


def pack_params(raw):
    """Pack raw torch-layout params for the kernel: transpose, fuse layer-1
    weights, fold biases, reorder gates to (i,f,o,g), cast MXU operands to bf16."""
    w_ih, w_hh = raw["w_ih"], raw["w_hh"]                      # (L, 4H, H)
    b = raw["b_ih"] + raw["b_hh"]                              # (L, 4H)
    H = w_ih.shape[-1]
    w0x = _reorder_ifog(w_ih[0].T, H).astype(jnp.bfloat16)     # (H, 4H)
    w0h = _reorder_ifog(w_hh[0].T, H).astype(jnp.bfloat16)     # (H, 4H)
    b0 = _reorder_ifog(b[0], H)                                # (4H,)  f32
    w1 = _reorder_ifog(jnp.concatenate([w_ih[1].T, w_hh[1].T], axis=0),
                       H).astype(jnp.bfloat16)                 # (2H, 4H)
    b1 = _reorder_ifog(b[1], H)[None, :]                       # (1, 4H) f32
    return {"w0x": w0x, "w0h": w0h, "w1": w1, "b0": b0, "b1": b1}


def lstm_translator_ref(z1_seq, z2, raw):
    """Pure-JAX f32 reference with PyTorch LSTM semantics (gate order i,f,g,o)."""
    w_ih, w_hh = raw["w_ih"], raw["w_hh"]                      # (L, 4H, H)
    b = raw["b_ih"] + raw["b_hh"]                              # (L, 4H)
    T, B, H = z1_seq.shape
    L = w_ih.shape[0]
    h0 = jnp.zeros((L, B, H), jnp.float32)
    c0 = jnp.broadcast_to(z2[0].astype(jnp.float32), (L, B, H))

    def step(carry, x_t):
        h, c = carry
        x = x_t.astype(jnp.float32)
        new_h, new_c = [], []
        for l in range(L):
            gates = x @ w_ih[l].T + h[l] @ w_hh[l].T + b[l]
            i = jax.nn.sigmoid(gates[:, 0 * H:1 * H])
            f = jax.nn.sigmoid(gates[:, 1 * H:2 * H])
            g = jnp.tanh(gates[:, 2 * H:3 * H])
            o = jax.nn.sigmoid(gates[:, 3 * H:4 * H])
            cn = f * c[l] + i * g
            hn = o * jnp.tanh(cn)
            new_h.append(hn)
            new_c.append(cn)
            x = hn
        return (jnp.stack(new_h), jnp.stack(new_c)), x

    (_, _), ys = jax.lax.scan(step, (h0, c0), z1_seq)
    return ys.astype(z1_seq.dtype)


if __name__ == "__main__":
    T, B, H = 8, 2, 32
    key = jax.random.PRNGKey(0)
    k_p, k_x, k_z = jax.random.split(key, 3)

    raw_params = init_raw_params(k_p, H)
    params = pack_params(raw_params)
    z1_seq = jax.random.normal(k_x, (T, B, H), jnp.float32)
    z2 = jax.random.normal(k_z, (1, B, H), jnp.float32)

    out = jax.block_until_ready(lstm_translator_forward(z1_seq, z2, params))
    ref = jax.block_until_ready(lstm_translator_ref(z1_seq, z2, raw_params))

    assert out.shape == (T, B, H)
    max_err = float(jnp.max(jnp.abs(out - ref)))
    # bf16 MXU operands vs. f32 reference -> loosened tolerance (per review).
    assert max_err < 2e-2, f"mismatch vs JAX reference: max abs err {max_err}"

    print("KERNEL_OK")
</pallas_src>

<mosaic_0001>
module attributes {stable_mosaic.version = 11 : i64} {
  func.func @lstm_chunk_kernel(%arg0: i32, %arg1: memref<1x8x32xf32, #tpu.memory_space<vmem>>, %arg2: memref<8x8x128xf32, #tpu.memory_space<vmem>>, %arg3: memref<32x128xbf16, #tpu.memory_space<vmem>>, %arg4: memref<64x128xbf16, #tpu.memory_space<vmem>>, %arg5: memref<1x128xf32, #tpu.memory_space<vmem>>, %arg6: memref<8x8x32xf32, #tpu.memory_space<vmem>>, %arg7: memref<8x32xf32, #tpu.memory_space<vmem>>, %arg8: memref<8x32xf32, #tpu.memory_space<vmem>>, %arg9: memref<8x32xf32, #tpu.memory_space<vmem>>, %arg10: memref<8x32xf32, #tpu.memory_space<vmem>>) attributes {dimension_semantics = [#tpu.dimension_semantics<arbitrary>], iteration_bounds = array<i64: 1>, scalar_prefetch = 0 : i64, scratch_operands = 4 : i64, tpu.core_type = #tpu.core_type<tc>, window_params = [{pipeline_mode = #tpu.pipeline_mode<synchronous>, transform_indices = @transform_0, window_bounds = array<i64: 1, 8, 32>}, {transform_indices = @transform_1, window_bounds = array<i64: 8, 8, 128>}, {pipeline_mode = #tpu.pipeline_mode<synchronous>, transform_indices = @transform_2, window_bounds = array<i64: 32, 128>}, {pipeline_mode = #tpu.pipeline_mode<synchronous>, transform_indices = @transform_3, window_bounds = array<i64: 64, 128>}, {pipeline_mode = #tpu.pipeline_mode<synchronous>, transform_indices = @transform_4, window_bounds = array<i64: 1, 128>}, {transform_indices = @transform_5, window_bounds = array<i64: 8, 8, 32>}]} {
    %c0_i32 = arith.constant 0 : i32
    %0 = arith.cmpi eq, %arg0, %c0_i32 : i32
    %1 = arith.extui %0 : i1 to i32
    %c0_i32_0 = arith.constant 0 : i32
    %2 = arith.cmpi ne, %1, %c0_i32_0 : i32
    scf.if %2 {
      %c0_198 = arith.constant 0 : index
      %c0_199 = arith.constant 0 : index
      %c0_200 = arith.constant 0 : index
      %440 = vector.load %arg1[%c0_198, %c0_199, %c0_200] : memref<1x8x32xf32, #tpu.memory_space<vmem>>, vector<1x8x32xf32>
      %441 = vector.shape_cast %440 : vector<1x8x32xf32> to vector<8x32xf32>
      %cst_201 = arith.constant 0.000000e+00 : f32
      %442 = vector.broadcast %cst_201 : f32 to vector<8x32xf32>
      %c0_202 = arith.constant 0 : index
      %c0_203 = arith.constant 0 : index
      %443 = vector.load %arg7[%c0_202, %c0_203] : memref<8x32xf32, #tpu.memory_space<vmem>>, vector<8x32xf32>
      tpu.vector_store %arg7[%c0_202, %c0_203], %442 {strides = array<i32>} : memref<8x32xf32, #tpu.memory_space<vmem>>, vector<8x32xf32>,
      %cst_204 = arith.constant 0.000000e+00 : f32
      %444 = vector.broadcast %cst_204 : f32 to vector<8x32xf32>
      %c0_205 = arith.constant 0 : index
      %c0_206 = arith.constant 0 : index
      %445 = vector.load %arg9[%c0_205, %c0_206] : memref<8x32xf32, #tpu.memory_space<vmem>>, vector<8x32xf32>
      tpu.vector_store %arg9[%c0_205, %c0_206], %444 {strides = array<i32>} : memref<8x32xf32, #tpu.memory_space<vmem>>, vector<8x32xf32>,
      %c0_207 = arith.constant 0 : index
      %c0_208 = arith.constant 0 : index
      %446 = vector.load %arg8[%c0_207, %c0_208] : memref<8x32xf32, #tpu.memory_space<vmem>>, vector<8x32xf32>
      tpu.vector_store %arg8[%c0_207, %c0_208], %441 {strides = array<i32>} : memref<8x32xf32, #tpu.memory_space<vmem>>, vector<8x32xf32>,
      %c0_209 = arith.constant 0 : index
      %c0_210 = arith.constant 0 : index
      %447 = vector.load %arg10[%c0_209, %c0_210] : memref<8x32xf32, #tpu.memory_space<vmem>>, vector<8x32xf32>
      tpu.vector_store %arg10[%c0_209, %c0_210], %441 {strides = array<i32>} : memref<8x32xf32, #tpu.memory_space<vmem>>, vector<8x32xf32>,
    } else {
    }
    %c0 = arith.constant 0 : index
    %c0_1 = arith.constant 0 : index
    %3 = vector.load %arg3[%c0, %c0_1] : memref<32x128xbf16, #tpu.memory_space<vmem>>, vector<32x128xbf16>
    %c0_2 = arith.constant 0 : index
    %c0_3 = arith.constant 0 : index
    %4 = vector.load %arg4[%c0_2, %c0_3] : memref<64x128xbf16, #tpu.memory_space<vmem>>, vector<64x128xbf16>
    %c0_4 = arith.constant 0 : index
    %c0_5 = arith.constant 0 : index
    %5 = vector.load %arg5[%c0_4, %c0_5] : memref<1x128xf32, #tpu.memory_space<vmem>>, vector<1x128xf32>
    %6 = vector.shape_cast %5 : vector<1x128xf32> to vector<1x128xf32>
    %7 = vector.broadcast %6 : vector<1x128xf32> to vector<8x128xf32>
    %c0_i32_6 = arith.constant 0 : i32
    %8 = arith.index_cast %c0_i32_6 : i32 to index
    %c0_7 = arith.constant 0 : index
    %c0_8 = arith.constant 0 : index
    %9 = vector.load %arg2[%8, %c0_7, %c0_8] : memref<8x8x128xf32, #tpu.memory_space<vmem>>, vector<1x8x128xf32>
    %10 = vector.shape_cast %9 : vector<1x8x128xf32> to vector<8x128xf32>
    %c0_9 = arith.constant 0 : index
    %c0_10 = arith.constant 0 : index
    %11 = vector.load %arg7[%c0_9, %c0_10] : memref<8x32xf32, #tpu.memory_space<vmem>>, vector<8x32xf32>
    %12 = arith.truncf %11 : vector<8x32xf32> to vector<8x32xbf16>
    %cst = arith.constant dense<0.000000e+00> : vector<8x128xf32>
    %13 = tpu.matmul %12, %3, %cst {dimension_numbers = #tpu.dot_dimension_numbers<[1], [0], [0], [1], [0, 0, 1, 1], [], []>} : vector<8x32xbf16>, vector<32x128xbf16>, vector<8x128xf32> -> vector<8x128xf32>
    %14 = arith.addf %10, %13 : vector<8x128xf32>
    %c0_11 = arith.constant 0 : index
    %c0_12 = arith.constant 0 : index
    %15 = vector.load %arg8[%c0_11, %c0_12] : memref<8x32xf32, #tpu.memory_space<vmem>>, vector<8x32xf32>
    %16 = vector.extract_strided_slice %14 {offsets = [0, 0], sizes = [8, 96], strides = [1, 1]} : vector<8x128xf32> to vector<8x96xf32>
    %17 = arith.negf %16 : vector<8x96xf32>
    %18 = math.exp %17 : vector<8x96xf32>
    %cst_13 = arith.constant 1.000000e+00 : f32
    %19 = vector.broadcast %cst_13 : f32 to vector<8x96xf32>
    %20 = arith.addf %19, %18 : vector<8x96xf32>
    %21 = arith.divf %19, %20 : vector<8x96xf32>
    %22 = vector.extract_strided_slice %14 {offsets = [0, 96], sizes = [8, 32], strides = [1, 1]} : vector<8x128xf32> to vector<8x32xf32>
    %23 = math.tanh %22 : vector<8x32xf32>
    %24 = vector.extract_strided_slice %21 {offsets = [0, 0], sizes = [8, 32], strides = [1, 1]} : vector<8x96xf32> to vector<8x32xf32>
    %25 = vector.extract_strided_slice %21 {offsets = [0, 32], sizes = [8, 32], strides = [1, 1]} : vector<8x96xf32> to vector<8x32xf32>
    %26 = vector.extract_strided_slice %21 {offsets = [0, 64], sizes = [8, 32], strides = [1, 1]} : vector<8x96xf32> to vector<8x32xf32>
    %27 = arith.mulf %25, %15 : vector<8x32xf32>
    %28 = arith.mulf %24, %23 : vector<8x32xf32>
    %29 = arith.addf %27, %28 : vector<8x32xf32>
    %30 = math.tanh %29 : vector<8x32xf32>
    %31 = arith.mulf %26, %30 : vector<8x32xf32>
    %c0_14 = arith.constant 0 : index
    %c0_15 = arith.constant 0 : index
    %32 = vector.load %arg7[%c0_14, %c0_15] : memref<8x32xf32, #tpu.memory_space<vmem>>, vector<8x32xf32>
    tpu.vector_store %arg7[%c0_14, %c0_15], %31 {strides = array<i32>} : memref<8x32xf32, #tpu.memory_space<vmem>>, vector<8x32xf32>,
    %c0_16 = arith.constant 0 : index
    %c0_17 = arith.constant 0 : index
    %33 = vector.load %arg8[%c0_16, %c0_17] : memref<8x32xf32, #tpu.memory_space<vmem>>, vector<8x32xf32>
    tpu.vector_store %arg8[%c0_16, %c0_17], %29 {strides = array<i32>} : memref<8x32xf32, #tpu.memory_space<vmem>>, vector<8x32xf32>,
    %c0_18 = arith.constant 0 : index
    %c0_19 = arith.constant 0 : index
    %34 = vector.load %arg9[%c0_18, %c0_19] : memref<8x32xf32, #tpu.memory_space<vmem>>, vector<8x32xf32>
    %35 = tpu.concatenate %31, %34 in 1 : vector<8x32xf32>, vector<8x32xf32> -> vector<8x64xf32>
    %36 = arith.truncf %35 : vector<8x64xf32> to vector<8x64xbf16>
    %cst_20 = arith.constant dense<0.000000e+00> : vector<8x128xf32>
    %37 = tpu.matmul %36, %4, %cst_20 {dimension_numbers = #tpu.dot_dimension_numbers<[1], [0], [0], [1], [0, 0, 1, 1], [], []>} : vector<8x64xbf16>, vector<64x128xbf16>, vector<8x128xf32> -> vector<8x128xf32>
    %38 = arith.addf %37, %7 : vector<8x128xf32>
    %c0_21 = arith.constant 0 : index
    %c0_22 = arith.constant 0 : index
    %39 = vector.load %arg10[%c0_21, %c0_22] : memref<8x32xf32, #tpu.memory_space<vmem>>, vector<8x32xf32>
    %40 = vector.extract_strided_slice %38 {offsets = [0, 0], sizes = [8, 96], strides = [1, 1]} : vector<8x128xf32> to vector<8x96xf32>
    %41 = arith.negf %40 : vector<8x96xf32>
    %42 = math.exp %41 : vector<8x96xf32>
    %cst_23 = arith.constant 1.000000e+00 : f32
    %43 = vector.broadcast %cst_23 : f32 to vector<8x96xf32>
    %44 = arith.addf %43, %42 : vector<8x96xf32>
    %45 = arith.divf %43, %44 : vector<8x96xf32>
    %46 = vector.extract_strided_slice %38 {offsets = [0, 96], sizes = [8, 32], strides = [1, 1]} : vector<8x128xf32> to vector<8x32xf32>
    %47 = math.tanh %46 : vector<8x32xf32>
    %48 = vector.extract_strided_slice %45 {offsets = [0, 0], sizes = [8, 32], strides = [1, 1]} : vector<8x96xf32> to vector<8x32xf32>
    %49 = vector.extract_strided_slice %45 {offsets = [0, 32], sizes = [8, 32], strides = [1, 1]} : vector<8x96xf32> to vector<8x32xf32>
    %50 = vector.extract_strided_slice %45 {offsets = [0, 64], sizes = [8, 32], strides = [1, 1]} : vector<8x96xf32> to vector<8x32xf32>
    %51 = arith.mulf %49, %39 : vector<8x32xf32>
    %52 = arith.mulf %48, %47 : vector<8x32xf32>
    %53 = arith.addf %51, %52 : vector<8x32xf32>
    %54 = math.tanh %53 : vector<8x32xf32>
    %55 = arith.mulf %50, %54 : vector<8x32xf32>
    %c0_24 = arith.constant 0 : index
    %c0_25 = arith.constant 0 : index
    %56 = vector.load %arg9[%c0_24, %c0_25] : memref<8x32xf32, #tpu.memory_space<vmem>>, vector<8x32xf32>
    tpu.vector_store %arg9[%c0_24, %c0_25], %55 {strides = array<i32>} : memref<8x32xf32, #tpu.memory_space<vmem>>, vector<8x32xf32>,
    %c0_26 = arith.constant 0 : index
    %c0_27 = arith.constant 0 : index
    %57 = vector.load %arg10[%c0_26, %c0_27] : memref<8x32xf32, #tpu.memory_space<vmem>>, vector<8x32xf32>
    tpu.vector_store %arg10[%c0_26, %c0_27], %53 {strides = array<i32>} : memref<8x32xf32, #tpu.memory_space<vmem>>, vector<8x32xf32>,
    %58 = arith.index_cast %c0_i32_6 : i32 to index
    %c0_28 = arith.constant 0 : index
    %c0_29 = arith.constant 0 : index
    %59 = vector.load %arg6[%58, %c0_28, %c0_29] : memref<8x8x32xf32, #tpu.memory_space<vmem>>, vector<1x8x32xf32>
    %60 = vector.shape_cast %59 : vector<1x8x32xf32> to vector<8x32xf32>
    %61 = vector.shape_cast %55 : vector<8x32xf32> to vector<1x8x32xf32>
    tpu.vector_store %arg6[%58, %c0_28, %c0_29], %61 {strides = array<i32>} : memref<8x8x32xf32, #tpu.memory_space<vmem>>, vector<1x8x32xf32>,
    %c1_i32 = arith.constant 1 : i32
    %62 = arith.index_cast %c1_i32 : i32 to index
    %c0_30 = arith.constant 0 : index
    %c0_31 = arith.constant 0 : index
    %63 = vector.load %arg2[%62, %c0_30, %c0_31] : memref<8x8x128xf32, #tpu.memory_space<vmem>>, vector<1x8x128xf32>
    %64 = vector.shape_cast %63 : vector<1x8x128xf32> to vector<8x128xf32>
    %c0_32 = arith.constant 0 : index
    %c0_33 = arith.constant 0 : index
    %65 = vector.load %arg7[%c0_32, %c0_33] : memref<8x32xf32, #tpu.memory_space<vmem>>, vector<8x32xf32>
    %66 = arith.truncf %65 : vector<8x32xf32> to vector<8x32xbf16>
    %cst_34 = arith.constant dense<0.000000e+00> : vector<8x128xf32>
    %67 = tpu.matmul %66, %3, %cst_34 {dimension_numbers = #tpu.dot_dimension_numbers<[1], [0], [0], [1], [0, 0, 1, 1], [], []>} : vector<8x32xbf16>, vector<32x128xbf16>, vector<8x128xf32> -> vector<8x128xf32>
    %68 = arith.addf %64, %67 : vector<8x128xf32>
    %c0_35 = arith.constant 0 : index
    %c0_36 = arith.constant 0 : index
    %69 = vector.load %arg8[%c0_35, %c0_36] : memref<8x32xf32, #tpu.memory_space<vmem>>, vector<8x32xf32>
    %70 = vector.extract_strided_slice %68 {offsets = [0, 0], sizes = [8, 96], strides = [1, 1]} : vector<8x128xf32> to vector<8x96xf32>
    %71 = arith.negf %70 : vector<8x96xf32>
    %72 = math.exp %71 : vector<8x96xf32>
    %cst_37 = arith.constant 1.000000e+00 : f32
    %73 = vector.broadcast %cst_37 : f32 to vector<8x96xf32>
    %74 = arith.addf %73, %72 : vector<8x96xf32>
    %75 = arith.divf %73, %74 : vector<8x96xf32>
    %76 = vector.extract_strided_slice %68 {offsets = [0, 96], sizes = [8, 32], strides = [1, 1]} : vector<8x128xf32> to vector<8x32xf32>
    %77 = math.tanh %76 : vector<8x32xf32>
    %78 = vector.extract_strided_slice %75 {offsets = [0, 0], sizes = [8, 32], strides = [1, 1]} : vector<8x96xf32> to vector<8x32xf32>
    %79 = vector.extract_strided_slice %75 {offsets = [0, 32], sizes = [8, 32], strides = [1, 1]} : vector<8x96xf32> to vector<8x32xf32>
    %80 = vector.extract_strided_slice %75 {offsets = [0, 64], sizes = [8, 32], strides = [1, 1]} : vector<8x96xf32> to vector<8x32xf32>
    %81 = arith.mulf %79, %69 : vector<8x32xf32>
    %82 = arith.mulf %78, %77 : vector<8x32xf32>
    %83 = arith.addf %81, %82 : vector<8x32xf32>
    %84 = math.tanh %83 : vector<8x32xf32>
    %85 = arith.mulf %80, %84 : vector<8x32xf32>
    %c0_38 = arith.constant 0 : index
    %c0_39 = arith.constant 0 : index
    %86 = vector.load %arg7[%c0_38, %c0_39] : memref<8x32xf32, #tpu.memory_space<vmem>>, vector<8x32xf32>
    tpu.vector_store %arg7[%c0_38, %c0_39], %85 {strides = array<i32>} : memref<8x32xf32, #tpu.memory_space<vmem>>, vector<8x32xf32>,
    %c0_40 = arith.constant 0 : index
    %c0_41 = arith.constant 0 : index
    %87 = vector.load %arg8[%c0_40, %c0_41] : memref<8x32xf32, #tpu.memory_space<vmem>>, vector<8x32xf32>
    tpu.vector_store %arg8[%c0_40, %c0_41], %83 {strides = array<i32>} : memref<8x32xf32, #tpu.memory_space<vmem>>, vector<8x32xf32>,
    %c0_42 = arith.constant 0 : index
    %c0_43 = arith.constant 0 : index
    %88 = vector.load %arg9[%c0_42, %c0_43] : memref<8x32xf32, #tpu.memory_space<vmem>>, vector<8x32xf32>
    %89 = tpu.concatenate %85, %88 in 1 : vector<8x32xf32>, vector<8x32xf32> -> vector<8x64xf32>
    %90 = arith.truncf %89 : vector<8x64xf32> to vector<8x64xbf16>
    %cst_44 = arith.constant dense<0.000000e+00> : vector<8x128xf32>
    %91 = tpu.matmul %90, %4, %cst_44 {dimension_numbers = #tpu.dot_dimension_numbers<[1], [0], [0], [1], [0, 0, 1, 1], [], []>} : vector<8x64xbf16>, vector<64x128xbf16>, vector<8x128xf32> -> vector<8x128xf32>
    %92 = arith.addf %91, %7 : vector<8x128xf32>
    %c0_45 = arith.constant 0 : index
    %c0_46 = arith.constant 0 : index
    %93 = vector.load %arg10[%c0_45, %c0_46] : memref<8x32xf32, #tpu.memory_space<vmem>>, vector<8x32xf32>
    %94 = vector.extract_strided_slice %92 {offsets = [0, 0], sizes = [8, 96], strides = [1, 1]} : vector<8x128xf32> to vector<8x96xf32>
    %95 = arith.negf %94 : vector<8x96xf32>
    %96 = math.exp %95 : vector<8x96xf32>
    %cst_47 = arith.constant 1.000000e+00 : f32
    %97 = vector.broadcast %cst_47 : f32 to vector<8x96xf32>
    %98 = arith.addf %97, %96 : vector<8x96xf32>
    %99 = arith.divf %97, %98 : vector<8x96xf32>
    %100 = vector.extract_strided_slice %92 {offsets = [0, 96], sizes = [8, 32], strides = [1, 1]} : vector<8x128xf32> to vector<8x32xf32>
    %101 = math.tanh %100 : vector<8x32xf32>
    %102 = vector.extract_strided_slice %99 {offsets = [0, 0], sizes = [8, 32], strides = [1, 1]} : vector<8x96xf32> to vector<8x32xf32>
    %103 = vector.extract_strided_slice %99 {offsets = [0, 32], sizes = [8, 32], strides = [1, 1]} : vector<8x96xf32> to vector<8x32xf32>
    %104 = vector.extract_strided_slice %99 {offsets = [0, 64], sizes = [8, 32], strides = [1, 1]} : vector<8x96xf32> to vector<8x32xf32>
    %105 = arith.mulf %103, %93 : vector<8x32xf32>
    %106 = arith.mulf %102, %101 : vector<8x32xf32>
    %107 = arith.addf %105, %106 : vector<8x32xf32>
    %108 = math.tanh %107 : vector<8x32xf32>
    %109 = arith.mulf %104, %108 : vector<8x32xf32>
    %c0_48 = arith.constant 0 : index
    %c0_49 = arith.constant 0 : index
    %110 = vector.load %arg9[%c0_48, %c0_49] : memref<8x32xf32, #tpu.memory_space<vmem>>, vector<8x32xf32>
    tpu.vector_store %arg9[%c0_48, %c0_49], %109 {strides = array<i32>} : memref<8x32xf32, #tpu.memory_space<vmem>>, vector<8x32xf32>,
    %c0_50 = arith.constant 0 : index
    %c0_51 = arith.constant 0 : index
    %111 = vector.load %arg10[%c0_50, %c0_51] : memref<8x32xf32, #tpu.memory_space<vmem>>, vector<8x32xf32>
    tpu.vector_store %arg10[%c0_50, %c0_51], %107 {strides = array<i32>} : memref<8x32xf32, #tpu.memory_space<vmem>>, vector<8x32xf32>,
    %112 = arith.index_cast %c1_i32 : i32 to index
    %c0_52 = arith.constant 0 : index
    %c0_53 = arith.constant 0 : index
    %113 = vector.load %arg6[%112, %c0_52, %c0_53] : memref<8x8x32xf32, #tpu.memory_space<vmem>>, vector<1x8x32xf32>
    %114 = vector.shape_cast %113 : vector<1x8x32xf32> to vector<8x32xf32>
    %115 = vector.shape_cast %109 : vector<8x32xf32> to vector<1x8x32xf32>
    tpu.vector_store %arg6[%112, %c0_52, %c0_53], %115 {strides = array<i32>} : memref<8x8x32xf32, #tpu.memory_space<vmem>>, vector<1x8x32xf32>,
    %c2_i32 = arith.constant 2 : i32
    %116 = arith.index_cast %c2_i32 : i32 to index
    %c0_54 = arith.constant 0 : index
    %c0_55 = arith.constant 0 : index
    %117 = vector.load %arg2[%116, %c0_54, %c0_55] : memref<8x8x128xf32, #tpu.memory_space<vmem>>, vector<1x8x128xf32>
    %118 = vector.shape_cast %117 : vector<1x8x128xf32> to vector<8x128xf32>
    %c0_56 = arith.constant 0 : index
    %c0_57 = arith.constant 0 : index
    %119 = vector.load %arg7[%c0_56, %c0_57] : memref<8x32xf32, #tpu.memory_space<vmem>>, vector<8x32xf32>
    %120 = arith.truncf %119 : vector<8x32xf32> to vector<8x32xbf16>
    %cst_58 = arith.constant dense<0.000000e+00> : vector<8x128xf32>
    %121 = tpu.matmul %120, %3, %cst_58 {dimension_numbers = #tpu.dot_dimension_numbers<[1], [0], [0], [1], [0, 0, 1, 1], [], []>} : vector<8x32xbf16>, vector<32x128xbf16>, vector<8x128xf32> -> vector<8x128xf32>
    %122 = arith.addf %118, %121 : vector<8x128xf32>
    %c0_59 = arith.constant 0 : index
    %c0_60 = arith.constant 0 : index
    %123 = vector.load %arg8[%c0_59, %c0_60] : memref<8x32xf32, #tpu.memory_space<vmem>>, vector<8x32xf32>
    %124 = vector.extract_strided_slice %122 {offsets = [0, 0], sizes = [8, 96], strides = [1, 1]} : vector<8x128xf32> to vector<8x96xf32>
    %125 = arith.negf %124 : vector<8x96xf32>
    %126 = math.exp %125 : vector<8x96xf32>
    %cst_61 = arith.constant 1.000000e+00 : f32
    %127 = vector.broadcast %cst_61 : f32 to vector<8x96xf32>
    %128 = arith.addf %127, %126 : vector<8x96xf32>
    %129 = arith.divf %127, %128 : vector<8x96xf32>
    %130 = vector.extract_strided_slice %122 {offsets = [0, 96], sizes = [8, 32], strides = [1, 1]} : vector<8x128xf32> to vector<8x32xf32>
    %131 = math.tanh %130 : vector<8x32xf32>
    %132 = vector.extract_strided_slice %129 {offsets = [0, 0], sizes = [8, 32], strides = [1, 1]} : vector<8x96xf32> to vector<8x32xf32>
    %133 = vector.extract_strided_slice %129 {offsets = [0, 32], sizes = [8, 32], strides = [1, 1]} : vector<8x96xf32> to vector<8x32xf32>
    %134 = vector.extract_strided_slice %129 {offsets = [0, 64], sizes = [8, 32], strides = [1, 1]} : vector<8x96xf32> to vector<8x32xf32>
    %135 = arith.mulf %133, %123 : vector<8x32xf32>
    %136 = arith.mulf %132, %131 : vector<8x32xf32>
    %137 = arith.addf %135, %136 : vector<8x32xf32>
    %138 = math.tanh %137 : vector<8x32xf32>
    %139 = arith.mulf %134, %138 : vector<8x32xf32>
    %c0_62 = arith.constant 0 : index
    %c0_63 = arith.constant 0 : index
    %140 = vector.load %arg7[%c0_62, %c0_63] : memref<8x32xf32, #tpu.memory_space<vmem>>, vector<8x32xf32>
    tpu.vector_store %arg7[%c0_62, %c0_63], %139 {strides = array<i32>} : memref<8x32xf32, #tpu.memory_space<vmem>>, vector<8x32xf32>,
    %c0_64 = arith.constant 0 : index
    %c0_65 = arith.constant 0 : index
    %141 = vector.load %arg8[%c0_64, %c0_65] : memref<8x32xf32, #tpu.memory_space<vmem>>, vector<8x32xf32>
    tpu.vector_store %arg8[%c0_64, %c0_65], %137 {strides = array<i32>} : memref<8x32xf32, #tpu.memory_space<vmem>>, vector<8x32xf32>,
    %c0_66 = arith.constant 0 : index
    %c0_67 = arith.constant 0 : index
    %142 = vector.load %arg9[%c0_66, %c0_67] : memref<8x32xf32, #tpu.memory_space<vmem>>, vector<8x32xf32>
    %143 = tpu.concatenate %139, %142 in 1 : vector<8x32xf32>, vector<8x32xf32> -> vector<8x64xf32>
    %144 = arith.truncf %143 : vector<8x64xf32> to vector<8x64xbf16>
    %cst_68 = arith.constant dense<0.000000e+00> : vector<8x128xf32>
    %145 = tpu.matmul %144, %4, %cst_68 {dimension_numbers = #tpu.dot_dimension_numbers<[1], [0], [0], [1], [0, 0, 1, 1], [], []>} : vector<8x64xbf16>, vector<64x128xbf16>, vector<8x128xf32> -> vector<8x128xf32>
    %146 = arith.addf %145, %7 : vector<8x128xf32>
    %c0_69 = arith.constant 0 : index
    %c0_70 = arith.constant 0 : index
    %147 = vector.load %arg10[%c0_69, %c0_70] : memref<8x32xf32, #tpu.memory_space<vmem>>, vector<8x32xf32>
    %148 = vector.extract_strided_slice %146 {offsets = [0, 0], sizes = [8, 96], strides = [1, 1]} : vector<8x128xf32> to vector<8x96xf32>
    %149 = arith.negf %148 : vector<8x96xf32>
    %150 = math.exp %149 : vector<8x96xf32>
    %cst_71 = arith.constant 1.000000e+00 : f32
    %151 = vector.broadcast %cst_71 : f32 to vector<8x96xf32>
    %152 = arith.addf %151, %150 : vector<8x96xf32>
    %153 = arith.divf %151, %152 : vector<8x96xf32>
    %154 = vector.extract_strided_slice %146 {offsets = [0, 96], sizes = [8, 32], strides = [1, 1]} : vector<8x128xf32> to vector<8x32xf32>
    %155 = math.tanh %154 : vector<8x32xf32>
    %156 = vector.extract_strided_slice %153 {offsets = [0, 0], sizes = [8, 32], strides = [1, 1]} : vector<8x96xf32> to vector<8x32xf32>
    %157 = vector.extract_strided_slice %153 {offsets = [0, 32], sizes = [8, 32], strides = [1, 1]} : vector<8x96xf32> to vector<8x32xf32>
    %158 = vector.extract_strided_slice %153 {offsets = [0, 64], sizes = [8, 32], strides = [1, 1]} : vector<8x96xf32> to vector<8x32xf32>
    %159 = arith.mulf %157, %147 : vector<8x32xf32>
    %160 = arith.mulf %156, %155 : vector<8x32xf32>
    %161 = arith.addf %159, %160 : vector<8x32xf32>
    %162 = math.tanh %161 : vector<8x32xf32>
    %163 = arith.mulf %158, %162 : vector<8x32xf32>
    %c0_72 = arith.constant 0 : index
    %c0_73 = arith.constant 0 : index
    %164 = vector.load %arg9[%c0_72, %c0_73] : memref<8x32xf32, #tpu.memory_space<vmem>>, vector<8x32xf32>
    tpu.vector_store %arg9[%c0_72, %c0_73], %163 {strides = array<i32>} : memref<8x32xf32, #tpu.memory_space<vmem>>, vector<8x32xf32>,
    %c0_74 = arith.constant 0 : index
    %c0_75 = arith.constant 0 : index
    %165 = vector.load %arg10[%c0_74, %c0_75] : memref<8x32xf32, #tpu.memory_space<vmem>>, vector<8x32xf32>
    tpu.vector_store %arg10[%c0_74, %c0_75], %161 {strides = array<i32>} : memref<8x32xf32, #tpu.memory_space<vmem>>, vector<8x32xf32>,
    %166 = arith.index_cast %c2_i32 : i32 to index
    %c0_76 = arith.constant 0 : index
    %c0_77 = arith.constant 0 : index
    %167 = vector.load %arg6[%166, %c0_76, %c0_77] : memref<8x8x32xf32, #tpu.memory_space<vmem>>, vector<1x8x32xf32>
    %168 = vector.shape_cast %167 : vector<1x8x32xf32> to vector<8x32xf32>
    %169 = vector.shape_cast %163 : vector<8x32xf32> to vector<1x8x32xf32>
    tpu.vector_store %arg6[%166, %c0_76, %c0_77], %169 {strides = array<i32>} : memref<8x8x32xf32, #tpu.memory_space<vmem>>, vector<1x8x32xf32>,
    %c3_i32 = arith.constant 3 : i32
    %170 = arith.index_cast %c3_i32 : i32 to index
    %c0_78 = arith.constant 0 : index
    %c0_79 = arith.constant 0 : index
    %171 = vector.load %arg2[%170, %c0_78, %c0_79] : memref<8x8x128xf32, #tpu.memory_space<vmem>>, vector<1x8x128xf32>
    %172 = vector.shape_cast %171 : vector<1x8x128xf32> to vector<8x128xf32>
    %c0_80 = arith.constant 0 : index
    %c0_81 = arith.constant 0 : index
    %173 = vector.load %arg7[%c0_80, %c0_81] : memref<8x32xf32, #tpu.memory_space<vmem>>, vector<8x32xf32>
    %174 = arith.truncf %173 : vector<8x32xf32> to vector<8x32xbf16>
    %cst_82 = arith.constant dense<0.000000e+00> : vector<8x128xf32>
    %175 = tpu.matmul %174, %3, %cst_82 {dimension_numbers = #tpu.dot_dimension_numbers<[1], [0], [0], [1], [0, 0, 1, 1], [], []>} : vector<8x32xbf16>, vector<32x128xbf16>, vector<8x128xf32> -> vector<8x128xf32>
    %176 = arith.addf %172, %175 : vector<8x128xf32>
    %c0_83 = arith.constant 0 : index
    %c0_84 = arith.constant 0 : index
    %177 = vector.load %arg8[%c0_83, %c0_84] : memref<8x32xf32, #tpu.memory_space<vmem>>, vector<8x32xf32>
    %178 = vector.extract_strided_slice %176 {offsets = [0, 0], sizes = [8, 96], strides = [1, 1]} : vector<8x128xf32> to vector<8x96xf32>
    %179 = arith.negf %178 : vector<8x96xf32>
    %180 = math.exp %179 : vector<8x96xf32>
    %cst_85 = arith.constant 1.000000e+00 : f32
    %181 = vector.broadcast %cst_85 : f32 to vector<8x96xf32>
    %182 = arith.addf %181, %180 : vector<8x96xf32>
    %183 = arith.divf %181, %182 : vector<8x96xf32>
    %184 = vector.extract_strided_slice %176 {offsets = [0, 96], sizes = [8, 32], strides = [1, 1]} : vector<8x128xf32> to vector<8x32xf32>
    %185 = math.tanh %184 : vector<8x32xf32>
    %186 = vector.extract_strided_slice %183 {offsets = [0, 0], sizes = [8, 32], strides = [1, 1]} : vector<8x96xf32> to vector<8x32xf32>
    %187 = vector.extract_strided_slice %183 {offsets = [0, 32], sizes = [8, 32], strides = [1, 1]} : vector<8x96xf32> to vector<8x32xf32>
    %188 = vector.extract_strided_slice %183 {offsets = [0, 64], sizes = [8, 32], strides = [1, 1]} : vector<8x96xf32> to vector<8x32xf32>
    %189 = arith.mulf %187, %177 : vector<8x32xf32>
    %190 = arith.mulf %186, %185 : vector<8x32xf32>
    %191 = arith.addf %189, %190 : vector<8x32xf32>
    %192 = math.tanh %191 : vector<8x32xf32>
    %193 = arith.mulf %188, %192 : vector<8x32xf32>
    %c0_86 = arith.constant 0 : index
    %c0_87 = arith.constant 0 : index
    %194 = vector.load %arg7[%c0_86, %c0_87] : memref<8x32xf32, #tpu.memory_space<vmem>>, vector<8x32xf32>
    tpu.vector_store %arg7[%c0_86, %c0_87], %193 {strides = array<i32>} : memref<8x32xf32, #tpu.memory_space<vmem>>, vector<8x32xf32>,
    %c0_88 = arith.constant 0 : index
    %c0_89 = arith.constant 0 : index
    %195 = vector.load %arg8[%c0_88, %c0_89] : memref<8x32xf32, #tpu.memory_space<vmem>>, vector<8x32xf32>
    tpu.vector_store %arg8[%c0_88, %c0_89], %191 {strides = array<i32>} : memref<8x32xf32, #tpu.memory_space<vmem>>, vector<8x32xf32>,
    %c0_90 = arith.constant 0 : index
    %c0_91 = arith.constant 0 : index
    %196 = vector.load %arg9[%c0_90, %c0_91] : memref<8x32xf32, #tpu.memory_space<vmem>>, vector<8x32xf32>
    %197 = tpu.concatenate %193, %196 in 1 : vector<8x32xf32>, vector<8x32xf32> -> vector<8x64xf32>
    %198 = arith.truncf %197 : vector<8x64xf32> to vector<8x64xbf16>
    %cst_92 = arith.constant dense<0.000000e+00> : vector<8x128xf32>
    %199 = tpu.matmul %198, %4, %cst_92 {dimension_numbers = #tpu.dot_dimension_numbers<[1], [0], [0], [1], [0, 0, 1, 1], [], []>} : vector<8x64xbf16>, vector<64x128xbf16>, vector<8x128xf32> -> vector<8x128xf32>
    %200 = arith.addf %199, %7 : vector<8x128xf32>
    %c0_93 = arith.constant 0 : index
    %c0_94 = arith.constant 0 : index
    %201 = vector.load %arg10[%c0_93, %c0_94] : memref<8x32xf32, #tpu.memory_space<vmem>>, vector<8x32xf32>
    %202 = vector.extract_strided_slice %200 {offsets = [0, 0], sizes = [8, 96], strides = [1, 1]} : vector<8x128xf32> to vector<8x96xf32>
    %203 = arith.negf %202 : vector<8x96xf32>
    %204 = math.exp %203 : vector<8x96xf32>
    %cst_95 = arith.constant 1.000000e+00 : f32
    %205 = vector.broadcast %cst_95 : f32 to vector<8x96xf32>
    %206 = arith.addf %205, %204 : vector<8x96xf32>
    %207 = arith.divf %205, %206 : vector<8x96xf32>
    %208 = vector.extract_strided_slice %200 {offsets = [0, 96], sizes = [8, 32], strides = [1, 1]} : vector<8x128xf32> to vector<8x32xf32>
    %209 = math.tanh %208 : vector<8x32xf32>
    %210 = vector.extract_strided_slice %207 {offsets = [0, 0], sizes = [8, 32], strides = [1, 1]} : vector<8x96xf32> to vector<8x32xf32>
    %211 = vector.extract_strided_slice %207 {offsets = [0, 32], sizes = [8, 32], strides = [1, 1]} : vector<8x96xf32> to vector<8x32xf32>
    %212 = vector.extract_strided_slice %207 {offsets = [0, 64], sizes = [8, 32], strides = [1, 1]} : vector<8x96xf32> to vector<8x32xf32>
    %213 = arith.mulf %211, %201 : vector<8x32xf32>
    %214 = arith.mulf %210, %209 : vector<8x32xf32>
    %215 = arith.addf %213, %214 : vector<8x32xf32>
    %216 = math.tanh %215 : vector<8x32xf32>
    %217 = arith.mulf %212, %216 : vector<8x32xf32>
    %c0_96 = arith.constant 0 : index
    %c0_97 = arith.constant 0 : index
    %218 = vector.load %arg9[%c0_96, %c0_97] : memref<8x32xf32, #tpu.memory_space<vmem>>, vector<8x32xf32>
    tpu.vector_store %arg9[%c0_96, %c0_97], %217 {strides = array<i32>} : memref<8x32xf32, #tpu.memory_space<vmem>>, vector<8x32xf32>,
    %c0_98 = arith.constant 0 : index
    %c0_99 = arith.constant 0 : index
    %219 = vector.load %arg10[%c0_98, %c0_99] : memref<8x32xf32, #tpu.memory_space<vmem>>, vector<8x32xf32>
    tpu.vector_store %arg10[%c0_98, %c0_99], %215 {strides = array<i32>} : memref<8x32xf32, #tpu.memory_space<vmem>>, vector<8x32xf32>,
    %220 = arith.index_cast %c3_i32 : i32 to index
    %c0_100 = arith.constant 0 : index
    %c0_101 = arith.constant 0 : index
    %221 = vector.load %arg6[%220, %c0_100, %c0_101] : memref<8x8x32xf32, #tpu.memory_space<vmem>>, vector<1x8x32xf32>
    %222 = vector.shape_cast %221 : vector<1x8x32xf32> to vector<8x32xf32>
    %223 = vector.shape_cast %217 : vector<8x32xf32> to vector<1x8x32xf32>
    tpu.vector_store %arg6[%220, %c0_100, %c0_101], %223 {strides = array<i32>} : memref<8x8x32xf32, #tpu.memory_space<vmem>>, vector<1x8x32xf32>,
    %c4_i32 = arith.constant 4 : i32
    %224 = arith.index_cast %c4_i32 : i32 to index
    %c0_102 = arith.constant 0 : index
    %c0_103 = arith.constant 0 : index
    %225 = vector.load %arg2[%224, %c0_102, %c0_103] : memref<8x8x128xf32, #tpu.memory_space<vmem>>, vector<1x8x128xf32>
    %226 = vector.shape_cast %225 : vector<1x8x128xf32> to vector<8x128xf32>
    %c0_104 = arith.constant 0 : index
    %c0_105 = arith.constant 0 : index
    %227 = vector.load %arg7[%c0_104, %c0_105] : memref<8x32xf32, #tpu.memory_space<vmem>>, vector<8x32xf32>
    %228 = arith.truncf %227 : vector<8x32xf32> to vector<8x32xbf16>
    %cst_106 = arith.constant dense<0.000000e+00> : vector<8x128xf32>
    %229 = tpu.matmul %228, %3, %cst_106 {dimension_numbers = #tpu.dot_dimension_numbers<[1], [0], [0], [1], [0, 0, 1, 1], [], []>} : vector<8x32xbf16>, vector<32x128xbf16>, vector<8x128xf32> -> vector<8x128xf32>
    %230 = arith.addf %226, %229 : vector<8x128xf32>
    %c0_107 = arith.constant 0 : index
    %c0_108 = arith.constant 0 : index
    %231 = vector.load %arg8[%c0_107, %c0_108] : memref<8x32xf32, #tpu.memory_space<vmem>>, vector<8x32xf32>
    %232 = vector.extract_strided_slice %230 {offsets = [0, 0], sizes = [8, 96], strides = [1, 1]} : vector<8x128xf32> to vector<8x96xf32>
    %233 = arith.negf %232 : vector<8x96xf32>
    %234 = math.exp %233 : vector<8x96xf32>
    %cst_109 = arith.constant 1.000000e+00 : f32
    %235 = vector.broadcast %cst_109 : f32 to vector<8x96xf32>
    %236 = arith.addf %235, %234 : vector<8x96xf32>
    %237 = arith.divf %235, %236 : vector<8x96xf32>
    %238 = vector.extract_strided_slice %230 {offsets = [0, 96], sizes = [8, 32], strides = [1, 1]} : vector<8x128xf32> to vector<8x32xf32>
    %239 = math.tanh %238 : vector<8x32xf32>
    %240 = vector.extract_strided_slice %237 {offsets = [0, 0], sizes = [8, 32], strides = [1, 1]} : vector<8x96xf32> to vector<8x32xf32>
    %241 = vector.extract_strided_slice %237 {offsets = [0, 32], sizes = [8, 32], strides = [1, 1]} : vector<8x96xf32> to vector<8x32xf32>
    %242 = vector.extract_strided_slice %237 {offsets = [0, 64], sizes = [8, 32], strides = [1, 1]} : vector<8x96xf32> to vector<8x32xf32>
    %243 = arith.mulf %241, %231 : vector<8x32xf32>
    %244 = arith.mulf %240, %239 : vector<8x32xf32>
    %245 = arith.addf %243, %244 : vector<8x32xf32>
    %246 = math.tanh %245 : vector<8x32xf32>
    %247 = arith.mulf %242, %246 : vector<8x32xf32>
    %c0_110 = arith.constant 0 : index
    %c0_111 = arith.constant 0 : index
    %248 = vector.load %arg7[%c0_110, %c0_111] : memref<8x32xf32, #tpu.memory_space<vmem>>, vector<8x32xf32>
    tpu.vector_store %arg7[%c0_110, %c0_111], %247 {strides = array<i32>} : memref<8x32xf32, #tpu.memory_space<vmem>>, vector<8x32xf32>,
    %c0_112 = arith.constant 0 : index
    %c0_113 = arith.constant 0 : index
    %249 = vector.load %arg8[%c0_112, %c0_113] : memref<8x32xf32, #tpu.memory_space<vmem>>, vector<8x32xf32>
    tpu.vector_store %arg8[%c0_112, %c0_113], %245 {strides = array<i32>} : memref<8x32xf32, #tpu.memory_space<vmem>>, vector<8x32xf32>,
    %c0_114 = arith.constant 0 : index
    %c0_115 = arith.constant 0 : index
    %250 = vector.load %arg9[%c0_114, %c0_115] : memref<8x32xf32, #tpu.memory_space<vmem>>, vector<8x32xf32>
    %251 = tpu.concatenate %247, %250 in 1 : vector<8x32xf32>, vector<8x32xf32> -> vector<8x64xf32>
    %252 = arith.truncf %251 : vector<8x64xf32> to vector<8x64xbf16>
    %cst_116 = arith.constant dense<0.000000e+00> : vector<8x128xf32>
    %253 = tpu.matmul %252, %4, %cst_116 {dimension_numbers = #tpu.dot_dimension_numbers<[1], [0], [0], [1], [0, 0, 1, 1], [], []>} : vector<8x64xbf16>, vector<64x128xbf16>, vector<8x128xf32> -> vector<8x128xf32>
    %254 = arith.addf %253, %7 : vector<8x128xf32>
    %c0_117 = arith.constant 0 : index
    %c0_118 = arith.constant 0 : index
    %255 = vector.load %arg10[%c0_117, %c0_118] : memref<8x32xf32, #tpu.memory_space<vmem>>, vector<8x32xf32>
    %256 = vector.extract_strided_slice %254 {offsets = [0, 0], sizes = [8, 96], strides = [1, 1]} : vector<8x128xf32> to vector<8x96xf32>
    %257 = arith.negf %256 : vector<8x96xf32>
    %258 = math.exp %257 : vector<8x96xf32>
    %cst_119 = arith.constant 1.000000e+00 : f32
    %259 = vector.broadcast %cst_119 : f32 to vector<8x96xf32>
    %260 = arith.addf %259, %258 : vector<8x96xf32>
    %261 = arith.divf %259, %260 : vector<8x96xf32>
    %262 = vector.extract_strided_slice %254 {offsets = [0, 96], sizes = [8, 32], strides = [1, 1]} : vector<8x128xf32> to vector<8x32xf32>
    %263 = math.tanh %262 : vector<8x32xf32>
    %264 = vector.extract_strided_slice %261 {offsets = [0, 0], sizes = [8, 32], strides = [1, 1]} : vector<8x96xf32> to vector<8x32xf32>
    %265 = vector.extract_strided_slice %261 {offsets = [0, 32], sizes = [8, 32], strides = [1, 1]} : vector<8x96xf32> to vector<8x32xf32>
    %266 = vector.extract_strided_slice %261 {offsets = [0, 64], sizes = [8, 32], strides = [1, 1]} : vector<8x96xf32> to vector<8x32xf32>
    %267 = arith.mulf %265, %255 : vector<8x32xf32>
    %268 = arith.mulf %264, %263 : vector<8x32xf32>
    %269 = arith.addf %267, %268 : vector<8x32xf32>
    %270 = math.tanh %269 : vector<8x32xf32>
    %271 = arith.mulf %266, %270 : vector<8x32xf32>
    %c0_120 = arith.constant 0 : index
    %c0_121 = arith.constant 0 : index
    %272 = vector.load %arg9[%c0_120, %c0_121] : memref<8x32xf32, #tpu.memory_space<vmem>>, vector<8x32xf32>
    tpu.vector_store %arg9[%c0_120, %c0_121], %271 {strides = array<i32>} : memref<8x32xf32, #tpu.memory_space<vmem>>, vector<8x32xf32>,
    %c0_122 = arith.constant 0 : index
    %c0_123 = arith.constant 0 : index
    %273 = vector.load %arg10[%c0_122, %c0_123] : memref<8x32xf32, #tpu.memory_space<vmem>>, vector<8x32xf32>
    tpu.vector_store %arg10[%c0_122, %c0_123], %269 {strides = array<i32>} : memref<8x32xf32, #tpu.memory_space<vmem>>, vector<8x32xf32>,
    %274 = arith.index_cast %c4_i32 : i32 to index
    %c0_124 = arith.constant 0 : index
    %c0_125 = arith.constant 0 : index
    %275 = vector.load %arg6[%274, %c0_124, %c0_125] : memref<8x8x32xf32, #tpu.memory_space<vmem>>, vector<1x8x32xf32>
    %276 = vector.shape_cast %275 : vector<1x8x32xf32> to vector<8x32xf32>
    %277 = vector.shape_cast %271 : vector<8x32xf32> to vector<1x8x32xf32>
    tpu.vector_store %arg6[%274, %c0_124, %c0_125], %277 {strides = array<i32>} : memref<8x8x32xf32, #tpu.memory_space<vmem>>, vector<1x8x32xf32>,
    %c5_i32 = arith.constant 5 : i32
    %278 = arith.index_cast %c5_i32 : i32 to index
    %c0_126 = arith.constant 0 : index
    %c0_127 = arith.constant 0 : index
    %279 = vector.load %arg2[%278, %c0_126, %c0_127] : memref<8x8x128xf32, #tpu.memory_space<vmem>>, vector<1x8x128xf32>
    %280 = vector.shape_cast %279 : vector<1x8x128xf32> to vector<8x128xf32>
    %c0_128 = arith.constant 0 : index
    %c0_129 = arith.constant 0 : index
    %281 = vector.load %arg7[%c0_128, %c0_129] : memref<8x32xf32, #tpu.memory_space<vmem>>, vector<8x32xf32>
    %282 = arith.truncf %281 : vector<8x32xf32> to vector<8x32xbf16>
    %cst_130 = arith.constant dense<0.000000e+00> : vector<8x128xf32>
    %283 = tpu.matmul %282, %3, %cst_130 {dimension_numbers = #tpu.dot_dimension_numbers<[1], [0], [0], [1], [0, 0, 1, 1], [], []>} : vector<8x32xbf16>, vector<32x128xbf16>, vector<8x128xf32> -> vector<8x128xf32>
    %284 = arith.addf %280, %283 : vector<8x128xf32>
    %c0_131 = arith.constant 0 : index
    %c0_132 = arith.constant 0 : index
    %285 = vector.load %arg8[%c0_131, %c0_132] : memref<8x32xf32, #tpu.memory_space<vmem>>, vector<8x32xf32>
    %286 = vector.extract_strided_slice %284 {offsets = [0, 0], sizes = [8, 96], strides = [1, 1]} : vector<8x128xf32> to vector<8x96xf32>
    %287 = arith.negf %286 : vector<8x96xf32>
    %288 = math.exp %287 : vector<8x96xf32>
    %cst_133 = arith.constant 1.000000e+00 : f32
    %289 = vector.broadcast %cst_133 : f32 to vector<8x96xf32>
    %290 = arith.addf %289, %288 : vector<8x96xf32>
    %291 = arith.divf %289, %290 : vector<8x96xf32>
    %292 = vector.extract_strided_slice %284 {offsets = [0, 96], sizes = [8, 32], strides = [1, 1]} : vector<8x128xf32> to vector<8x32xf32>
    %293 = math.tanh %292 : vector<8x32xf32>
    %294 = vector.extract_strided_slice %291 {offsets = [0, 0], sizes = [8, 32], strides = [1, 1]} : vector<8x96xf32> to vector<8x32xf32>
    %295 = vector.extract_strided_slice %291 {offsets = [0, 32], sizes = [8, 32], strides = [1, 1]} : vector<8x96xf32> to vector<8x32xf32>
    %296 = vector.extract_strided_slice %291 {offsets = [0, 64], sizes = [8, 32], strides = [1, 1]} : vector<8x96xf32> to vector<8x32xf32>
    %297 = arith.mulf %295, %285 : vector<8x32xf32>
    %298 = arith.mulf %294, %293 : vector<8x32xf32>
    %299 = arith.addf %297, %298 : vector<8x32xf32>
    %300 = math.tanh %299 : vector<8x32xf32>
    %301 = arith.mulf %296, %300 : vector<8x32xf32>
    %c0_134 = arith.constant 0 : index
    %c0_135 = arith.constant 0 : index
    %302 = vector.load %arg7[%c0_134, %c0_135] : memref<8x32xf32, #tpu.memory_space<vmem>>, vector<8x32xf32>
    tpu.vector_store %arg7[%c0_134, %c0_135], %301 {strides = array<i32>} : memref<8x32xf32, #tpu.memory_space<vmem>>, vector<8x32xf32>,
    %c0_136 = arith.constant 0 : index
    %c0_137 = arith.constant 0 : index
    %303 = vector.load %arg8[%c0_136, %c0_137] : memref<8x32xf32, #tpu.memory_space<vmem>>, vector<8x32xf32>
    tpu.vector_store %arg8[%c0_136, %c0_137], %299 {strides = array<i32>} : memref<8x32xf32, #tpu.memory_space<vmem>>, vector<8x32xf32>,
    %c0_138 = arith.constant 0 : index
    %c0_139 = arith.constant 0 : index
    %304 = vector.load %arg9[%c0_138, %c0_139] : memref<8x32xf32, #tpu.memory_space<vmem>>, vector<8x32xf32>
    %305 = tpu.concatenate %301, %304 in 1 : vector<8x32xf32>, vector<8x32xf32> -> vector<8x64xf32>
    %306 = arith.truncf %305 : vector<8x64xf32> to vector<8x64xbf16>
    %cst_140 = arith.constant dense<0.000000e+00> : vector<8x128xf32>
    %307 = tpu.matmul %306, %4, %cst_140 {dimension_numbers = #tpu.dot_dimension_numbers<[1], [0], [0], [1], [0, 0, 1, 1], [], []>} : vector<8x64xbf16>, vector<64x128xbf16>, vector<8x128xf32> -> vector<8x128xf32>
    %308 = arith.addf %307, %7 : vector<8x128xf32>
    %c0_141 = arith.constant 0 : index
    %c0_142 = arith.constant 0 : index
    %309 = vector.load %arg10[%c0_141, %c0_142] : memref<8x32xf32, #tpu.memory_space<vmem>>, vector<8x32xf32>
    %310 = vector.extract_strided_slice %308 {offsets = [0, 0], sizes = [8, 96], strides = [1, 1]} : vector<8x128xf32> to vector<8x96xf32>
    %311 = arith.negf %310 : vector<8x96xf32>
    %312 = math.exp %311 : vector<8x96xf32>
    %cst_143 = arith.constant 1.000000e+00 : f32
    %313 = vector.broadcast %cst_143 : f32 to vector<8x96xf32>
    %314 = arith.addf %313, %312 : vector<8x96xf32>
    %315 = arith.divf %313, %314 : vector<8x96xf32>
    %316 = vector.extract_strided_slice %308 {offsets = [0, 96], sizes = [8, 32], strides = [1, 1]} : vector<8x128xf32> to vector<8x32xf32>
    %317 = math.tanh %316 : vector<8x32xf32>
    %318 = vector.extract_strided_slice %315 {offsets = [0, 0], sizes = [8, 32], strides = [1, 1]} : vector<8x96xf32> to vector<8x32xf32>
    %319 = vector.extract_strided_slice %315 {offsets = [0, 32], sizes = [8, 32], strides = [1, 1]} : vector<8x96xf32> to vector<8x32xf32>
    %320 = vector.extract_strided_slice %315 {offsets = [0, 64], sizes = [8, 32], strides = [1, 1]} : vector<8x96xf32> to vector<8x32xf32>
    %321 = arith.mulf %319, %309 : vector<8x32xf32>
    %322 = arith.mulf %318, %317 : vector<8x32xf32>
    %323 = arith.addf %321, %322 : vector<8x32xf32>
    %324 = math.tanh %323 : vector<8x32xf32>
    %325 = arith.mulf %320, %324 : vector<8x32xf32>
    %c0_144 = arith.constant 0 : index
    %c0_145 = arith.constant 0 : index
    %326 = vector.load %arg9[%c0_144, %c0_145] : memref<8x32xf32, #tpu.memory_space<vmem>>, vector<8x32xf32>
    tpu.vector_store %arg9[%c0_144, %c0_145], %325 {strides = array<i32>} : memref<8x32xf32, #tpu.memory_space<vmem>>, vector<8x32xf32>,
    %c0_146 = arith.constant 0 : index
    %c0_147 = arith.constant 0 : index
    %327 = vector.load %arg10[%c0_146, %c0_147] : memref<8x32xf32, #tpu.memory_space<vmem>>, vector<8x32xf32>
    tpu.vector_store %arg10[%c0_146, %c0_147], %323 {strides = array<i32>} : memref<8x32xf32, #tpu.memory_space<vmem>>, vector<8x32xf32>,
    %328 = arith.index_cast %c5_i32 : i32 to index
    %c0_148 = arith.constant 0 : index
    %c0_149 = arith.constant 0 : index
    %329 = vector.load %arg6[%328, %c0_148, %c0_149] : memref<8x8x32xf32, #tpu.memory_space<vmem>>, vector<1x8x32xf32>
    %330 = vector.shape_cast %329 : vector<1x8x32xf32> to vector<8x32xf32>
    %331 = vector.shape_cast %325 : vector<8x32xf32> to vector<1x8x32xf32>
    tpu.vector_store %arg6[%328, %c0_148, %c0_149], %331 {strides = array<i32>} : memref<8x8x32xf32, #tpu.memory_space<vmem>>, vector<1x8x32xf32>,
    %c6_i32 = arith.constant 6 : i32
    %332 = arith.index_cast %c6_i32 : i32 to index
    %c0_150 = arith.constant 0 : index
    %c0_151 = arith.constant 0 : index
    %333 = vector.load %arg2[%332, %c0_150, %c0_151] : memref<8x8x128xf32, #tpu.memory_space<vmem>>, vector<1x8x128xf32>
    %334 = vector.shape_cast %333 : vector<1x8x128xf32> to vector<8x128xf32>
    %c0_152 = arith.constant 0 : index
    %c0_153 = arith.constant 0 : index
    %335 = vector.load %arg7[%c0_152, %c0_153] : memref<8x32xf32, #tpu.memory_space<vmem>>, vector<8x32xf32>
    %336 = arith.truncf %335 : vector<8x32xf32> to vector<8x32xbf16>
    %cst_154 = arith.constant dense<0.000000e+00> : vector<8x128xf32>
    %337 = tpu.matmul %336, %3, %cst_154 {dimension_numbers = #tpu.dot_dimension_numbers<[1], [0], [0], [1], [0, 0, 1, 1], [], []>} : vector<8x32xbf16>, vector<32x128xbf16>, vector<8x128xf32> -> vector<8x128xf32>
    %338 = arith.addf %334, %337 : vector<8x128xf32>
    %c0_155 = arith.constant 0 : index
    %c0_156 = arith.constant 0 : index
    %339 = vector.load %arg8[%c0_155, %c0_156] : memref<8x32xf32, #tpu.memory_space<vmem>>, vector<8x32xf32>
    %340 = vector.extract_strided_slice %338 {offsets = [0, 0], sizes = [8, 96], strides = [1, 1]} : vector<8x128xf32> to vector<8x96xf32>
    %341 = arith.negf %340 : vector<8x96xf32>
    %342 = math.exp %341 : vector<8x96xf32>
    %cst_157 = arith.constant 1.000000e+00 : f32
    %343 = vector.broadcast %cst_157 : f32 to vector<8x96xf32>
    %344 = arith.addf %343, %342 : vector<8x96xf32>
    %345 = arith.divf %343, %344 : vector<8x96xf32>
    %346 = vector.extract_strided_slice %338 {offsets = [0, 96], sizes = [8, 32], strides = [1, 1]} : vector<8x128xf32> to vector<8x32xf32>
    %347 = math.tanh %346 : vector<8x32xf32>
    %348 = vector.extract_strided_slice %345 {offsets = [0, 0], sizes = [8, 32], strides = [1, 1]} : vector<8x96xf32> to vector<8x32xf32>
    %349 = vector.extract_strided_slice %345 {offsets = [0, 32], sizes = [8, 32], strides = [1, 1]} : vector<8x96xf32> to vector<8x32xf32>
    %350 = vector.extract_strided_slice %345 {offsets = [0, 64], sizes = [8, 32], strides = [1, 1]} : vector<8x96xf32> to vector<8x32xf32>
    %351 = arith.mulf %349, %339 : vector<8x32xf32>
    %352 = arith.mulf %348, %347 : vector<8x32xf32>
    %353 = arith.addf %351, %352 : vector<8x32xf32>
    %354 = math.tanh %353 : vector<8x32xf32>
    %355 = arith.mulf %350, %354 : vector<8x32xf32>
    %c0_158 = arith.constant 0 : index
    %c0_159 = arith.constant 0 : index
    %356 = vector.load %arg7[%c0_158, %c0_159] : memref<8x32xf32, #tpu.memory_space<vmem>>, vector<8x32xf32>
    tpu.vector_store %arg7[%c0_158, %c0_159], %355 {strides = array<i32>} : memref<8x32xf32, #tpu.memory_space<vmem>>, vector<8x32xf32>,
    %c0_160 = arith.constant 0 : index
    %c0_161 = arith.constant 0 : index
    %357 = vector.load %arg8[%c0_160, %c0_161] : memref<8x32xf32, #tpu.memory_space<vmem>>, vector<8x32xf32>
    tpu.vector_store %arg8[%c0_160, %c0_161], %353 {strides = array<i32>} : memref<8x32xf32, #tpu.memory_space<vmem>>, vector<8x32xf32>,
    %c0_162 = arith.constant 0 : index
    %c0_163 = arith.constant 0 : index
    %358 = vector.load %arg9[%c0_162, %c0_163] : memref<8x32xf32, #tpu.memory_space<vmem>>, vector<8x32xf32>
    %359 = tpu.concatenate %355, %358 in 1 : vector<8x32xf32>, vector<8x32xf32> -> vector<8x64xf32>
    %360 = arith.truncf %359 : vector<8x64xf32> to vector<8x64xbf16>
    %cst_164 = arith.constant dense<0.000000e+00> : vector<8x128xf32>
    %361 = tpu.matmul %360, %4, %cst_164 {dimension_numbers = #tpu.dot_dimension_numbers<[1], [0], [0], [1], [0, 0, 1, 1], [], []>} : vector<8x64xbf16>, vector<64x128xbf16>, vector<8x128xf32> -> vector<8x128xf32>
    %362 = arith.addf %361, %7 : vector<8x128xf32>
    %c0_165 = arith.constant 0 : index
    %c0_166 = arith.constant 0 : index
    %363 = vector.load %arg10[%c0_165, %c0_166] : memref<8x32xf32, #tpu.memory_space<vmem>>, vector<8x32xf32>
    %364 = vector.extract_strided_slice %362 {offsets = [0, 0], sizes = [8, 96], strides = [1, 1]} : vector<8x128xf32> to vector<8x96xf32>
    %365 = arith.negf %364 : vector<8x96xf32>
    %366 = math.exp %365 : vector<8x96xf32>
    %cst_167 = arith.constant 1.000000e+00 : f32
    %367 = vector.broadcast %cst_167 : f32 to vector<8x96xf32>
    %368 = arith.addf %367, %366 : vector<8x96xf32>
    %369 = arith.divf %367, %368 : vector<8x96xf32>
    %370 = vector.extract_strided_slice %362 {offsets = [0, 96], sizes = [8, 32], strides = [1, 1]} : vector<8x128xf32> to vector<8x32xf32>
    %371 = math.tanh %370 : vector<8x32xf32>
    %372 = vector.extract_strided_slice %369 {offsets = [0, 0], sizes = [8, 32], strides = [1, 1]} : vector<8x96xf32> to vector<8x32xf32>
    %373 = vector.extract_strided_slice %369 {offsets = [0, 32], sizes = [8, 32], strides = [1, 1]} : vector<8x96xf32> to vector<8x32xf32>
    %374 = vector.extract_strided_slice %369 {offsets = [0, 64], sizes = [8, 32], strides = [1, 1]} : vector<8x96xf32> to vector<8x32xf32>
    %375 = arith.mulf %373, %363 : vector<8x32xf32>
    %376 = arith.mulf %372, %371 : vector<8x32xf32>
    %377 = arith.addf %375, %376 : vector<8x32xf32>
    %378 = math.tanh %377 : vector<8x32xf32>
    %379 = arith.mulf %374, %378 : vector<8x32xf32>
    %c0_168 = arith.constant 0 : index
    %c0_169 = arith.constant 0 : index
    %380 = vector.load %arg9[%c0_168, %c0_169] : memref<8x32xf32, #tpu.memory_space<vmem>>, vector<8x32xf32>
    tpu.vector_store %arg9[%c0_168, %c0_169], %379 {strides = array<i32>} : memref<8x32xf32, #tpu.memory_space<vmem>>, vector<8x32xf32>,
    %c0_170 = arith.constant 0 : index
    %c0_171 = arith.constant 0 : index
    %381 = vector.load %arg10[%c0_170, %c0_171] : memref<8x32xf32, #tpu.memory_space<vmem>>, vector<8x32xf32>
    tpu.vector_store %arg10[%c0_170, %c0_171], %377 {strides = array<i32>} : memref<8x32xf32, #tpu.memory_space<vmem>>, vector<8x32xf32>,
    %382 = arith.index_cast %c6_i32 : i32 to index
    %c0_172 = arith.constant 0 : index
    %c0_173 = arith.constant 0 : index
    %383 = vector.load %arg6[%382, %c0_172, %c0_173] : memref<8x8x32xf32, #tpu.memory_space<vmem>>, vector<1x8x32xf32>
    %384 = vector.shape_cast %383 : vector<1x8x32xf32> to vector<8x32xf32>
    %385 = vector.shape_cast %379 : vector<8x32xf32> to vector<1x8x32xf32>
    tpu.vector_store %arg6[%382, %c0_172, %c0_173], %385 {strides = array<i32>} : memref<8x8x32xf32, #tpu.memory_space<vmem>>, vector<1x8x32xf32>,
    %c7_i32 = arith.constant 7 : i32
    %386 = arith.index_cast %c7_i32 : i32 to index
    %c0_174 = arith.constant 0 : index
    %c0_175 = arith.constant 0 : index
    %387 = vector.load %arg2[%386, %c0_174, %c0_175] : memref<8x8x128xf32, #tpu.memory_space<vmem>>, vector<1x8x128xf32>
    %388 = vector.shape_cast %387 : vector<1x8x128xf32> to vector<8x128xf32>
    %c0_176 = arith.constant 0 : index
    %c0_177 = arith.constant 0 : index
    %389 = vector.load %arg7[%c0_176, %c0_177] : memref<8x32xf32, #tpu.memory_space<vmem>>, vector<8x32xf32>
    %390 = arith.truncf %389 : vector<8x32xf32> to vector<8x32xbf16>
    %cst_178 = arith.constant dense<0.000000e+00> : vector<8x128xf32>
    %391 = tpu.matmul %390, %3, %cst_178 {dimension_numbers = #tpu.dot_dimension_numbers<[1], [0], [0], [1], [0, 0, 1, 1], [], []>} : vector<8x32xbf16>, vector<32x128xbf16>, vector<8x128xf32> -> vector<8x128xf32>
    %392 = arith.addf %388, %391 : vector<8x128xf32>
    %c0_179 = arith.constant 0 : index
    %c0_180 = arith.constant 0 : index
    %393 = vector.load %arg8[%c0_179, %c0_180] : memref<8x32xf32, #tpu.memory_space<vmem>>, vector<8x32xf32>
    %394 = vector.extract_strided_slice %392 {offsets = [0, 0], sizes = [8, 96], strides = [1, 1]} : vector<8x128xf32> to vector<8x96xf32>
    %395 = arith.negf %394 : vector<8x96xf32>
    %396 = math.exp %395 : vector<8x96xf32>
    %cst_181 = arith.constant 1.000000e+00 : f32
    %397 = vector.broadcast %cst_181 : f32 to vector<8x96xf32>
    %398 = arith.addf %397, %396 : vector<8x96xf32>
    %399 = arith.divf %397, %398 : vector<8x96xf32>
    %400 = vector.extract_strided_slice %392 {offsets = [0, 96], sizes = [8, 32], strides = [1, 1]} : vector<8x128xf32> to vector<8x32xf32>
    %401 = math.tanh %400 : vector<8x32xf32>
    %402 = vector.extract_strided_slice %399 {offsets = [0, 0], sizes = [8, 32], strides = [1, 1]} : vector<8x96xf32> to vector<8x32xf32>
    %403 = vector.extract_strided_slice %399 {offsets = [0, 32], sizes = [8, 32], strides = [1, 1]} : vector<8x96xf32> to vector<8x32xf32>
    %404 = vector.extract_strided_slice %399 {offsets = [0, 64], sizes = [8, 32], strides = [1, 1]} : vector<8x96xf32> to vector<8x32xf32>
    %405 = arith.mulf %403, %393 : vector<8x32xf32>
    %406 = arith.mulf %402, %401 : vector<8x32xf32>
    %407 = arith.addf %405, %406 : vector<8x32xf32>
    %408 = math.tanh %407 : vector<8x32xf32>
    %409 = arith.mulf %404, %408 : vector<8x32xf32>
    %c0_182 = arith.constant 0 : index
    %c0_183 = arith.constant 0 : index
    %410 = vector.load %arg7[%c0_182, %c0_183] : memref<8x32xf32, #tpu.memory_space<vmem>>, vector<8x32xf32>
    tpu.vector_store %arg7[%c0_182, %c0_183], %409 {strides = array<i32>} : memref<8x32xf32, #tpu.memory_space<vmem>>, vector<8x32xf32>,
    %c0_184 = arith.constant 0 : index
    %c0_185 = arith.constant 0 : index
    %411 = vector.load %arg8[%c0_184, %c0_185] : memref<8x32xf32, #tpu.memory_space<vmem>>, vector<8x32xf32>
    tpu.vector_store %arg8[%c0_184, %c0_185], %407 {strides = array<i32>} : memref<8x32xf32, #tpu.memory_space<vmem>>, vector<8x32xf32>,
    %c0_186 = arith.constant 0 : index
    %c0_187 = arith.constant 0 : index
    %412 = vector.load %arg9[%c0_186, %c0_187] : memref<8x32xf32, #tpu.memory_space<vmem>>, vector<8x32xf32>
    %413 = tpu.concatenate %409, %412 in 1 : vector<8x32xf32>, vector<8x32xf32> -> vector<8x64xf32>
    %414 = arith.truncf %413 : vector<8x64xf32> to vector<8x64xbf16>
    %cst_188 = arith.constant dense<0.000000e+00> : vector<8x128xf32>
    %415 = tpu.matmul %414, %4, %cst_188 {dimension_numbers = #tpu.dot_dimension_numbers<[1], [0], [0], [1], [0, 0, 1, 1], [], []>} : vector<8x64xbf16>, vector<64x128xbf16>, vector<8x128xf32> -> vector<8x128xf32>
    %416 = arith.addf %415, %7 : vector<8x128xf32>
    %c0_189 = arith.constant 0 : index
    %c0_190 = arith.constant 0 : index
    %417 = vector.load %arg10[%c0_189, %c0_190] : memref<8x32xf32, #tpu.memory_space<vmem>>, vector<8x32xf32>
    %418 = vector.extract_strided_slice %416 {offsets = [0, 0], sizes = [8, 96], strides = [1, 1]} : vector<8x128xf32> to vector<8x96xf32>
    %419 = arith.negf %418 : vector<8x96xf32>
    %420 = math.exp %419 : vector<8x96xf32>
    %cst_191 = arith.constant 1.000000e+00 : f32
    %421 = vector.broadcast %cst_191 : f32 to vector<8x96xf32>
    %422 = arith.addf %421, %420 : vector<8x96xf32>
    %423 = arith.divf %421, %422 : vector<8x96xf32>
    %424 = vector.extract_strided_slice %416 {offsets = [0, 96], sizes = [8, 32], strides = [1, 1]} : vector<8x128xf32> to vector<8x32xf32>
    %425 = math.tanh %424 : vector<8x32xf32>
    %426 = vector.extract_strided_slice %423 {offsets = [0, 0], sizes = [8, 32], strides = [1, 1]} : vector<8x96xf32> to vector<8x32xf32>
    %427 = vector.extract_strided_slice %423 {offsets = [0, 32], sizes = [8, 32], strides = [1, 1]} : vector<8x96xf32> to vector<8x32xf32>
    %428 = vector.extract_strided_slice %423 {offsets = [0, 64], sizes = [8, 32], strides = [1, 1]} : vector<8x96xf32> to vector<8x32xf32>
    %429 = arith.mulf %427, %417 : vector<8x32xf32>
    %430 = arith.mulf %426, %425 : vector<8x32xf32>
    %431 = arith.addf %429, %430 : vector<8x32xf32>
    %432 = math.tanh %431 : vector<8x32xf32>
    %433 = arith.mulf %428, %432 : vector<8x32xf32>
    %c0_192 = arith.constant 0 : index
    %c0_193 = arith.constant 0 : index
    %434 = vector.load %arg9[%c0_192, %c0_193] : memref<8x32xf32, #tpu.memory_space<vmem>>, vector<8x32xf32>
    tpu.vector_store %arg9[%c0_192, %c0_193], %433 {strides = array<i32>} : memref<8x32xf32, #tpu.memory_space<vmem>>, vector<8x32xf32>,
    %c0_194 = arith.constant 0 : index
    %c0_195 = arith.constant 0 : index
    %435 = vector.load %arg10[%c0_194, %c0_195] : memref<8x32xf32, #tpu.memory_space<vmem>>, vector<8x32xf32>
    tpu.vector_store %arg10[%c0_194, %c0_195], %431 {strides = array<i32>} : memref<8x32xf32, #tpu.memory_space<vmem>>, vector<8x32xf32>,
    %436 = arith.index_cast %c7_i32 : i32 to index
    %c0_196 = arith.constant 0 : index
    %c0_197 = arith.constant 0 : index
    %437 = vector.load %arg6[%436, %c0_196, %c0_197] : memref<8x8x32xf32, #tpu.memory_space<vmem>>, vector<1x8x32xf32>
    %438 = vector.shape_cast %437 : vector<1x8x32xf32> to vector<8x32xf32>
    %439 = vector.shape_cast %433 : vector<8x32xf32> to vector<1x8x32xf32>
    tpu.vector_store %arg6[%436, %c0_196, %c0_197], %439 {strides = array<i32>} : memref<8x8x32xf32, #tpu.memory_space<vmem>>, vector<1x8x32xf32>,
    %c8_i32 = arith.constant 8 : i32
    return
  }
  func.func @transform_0(%arg0: i32) -> (i32, i32, i32) {
    %c0_i32 = arith.constant 0 : i32
    %c0_i32_0 = arith.constant 0 : i32
    %c0_i32_1 = arith.constant 0 : i32
    %c0_i32_2 = arith.constant 0 : i32
    return %c0_i32, %c0_i32_0, %c0_i32_1 : i32, i32, i32
  }
  func.func @transform_1(%arg0: i32) -> (i32, i32, i32) {
    %c0_i32 = arith.constant 0 : i32
    %c0_i32_0 = arith.constant 0 : i32
    %c0_i32_1 = arith.constant 0 : i32
    return %arg0, %c0_i32, %c0_i32_0 : i32, i32, i32
  }
  func.func @transform_2(%arg0: i32) -> (i32, i32) {
    %c0_i32 = arith.constant 0 : i32
    %c0_i32_0 = arith.constant 0 : i32
    %c0_i32_1 = arith.constant 0 : i32
    return %c0_i32, %c0_i32_0 : i32, i32
  }
  func.func @transform_3(%arg0: i32) -> (i32, i32) {
    %c0_i32 = arith.constant 0 : i32
    %c0_i32_0 = arith.constant 0 : i32
    %c0_i32_1 = arith.constant 0 : i32
    return %c0_i32, %c0_i32_0 : i32, i32
  }
  func.func @transform_4(%arg0: i32) -> (i32, i32) {
    %c0_i32 = arith.constant 0 : i32
    %c0_i32_0 = arith.constant 0 : i32
    %c0_i32_1 = arith.constant 0 : i32
    return %c0_i32, %c0_i32_0 : i32, i32
  }
  func.func @transform_5(%arg0: i32) -> (i32, i32, i32) {
    %c0_i32 = arith.constant 0 : i32
    %c0_i32_0 = arith.constant 0 : i32
    %c0_i32_1 = arith.constant 0 : i32
    return %arg0, %c0_i32, %c0_i32_0 : i32, i32, i32
  }
}

</mosaic_0001>

<llo_original>
// kernel: tpu_custom_call.1
$region0: #{tpu_custom_call.1}
  #allocation0 [shape = 'u32[]', space=smem, size = 0x4, offset = 0x4, fixed_abs, tag = 'smem constant byte address 0x4 - core index']
  #allocation1 [shape = 'u32[144,128]{1,0:T(1,128)}', space=vmem, size = 0x12000, scoped, tag = 'internal scratch']
  #allocation2 [shape = 'f32[8,32]{1,0:T(8,128)}', space=vmem, size = 0x1000, scoped, tag = 'scratch operand']
  #allocation3 [shape = 'f32[8,32]{1,0:T(8,128)}', space=vmem, size = 0x1000, scoped, tag = 'scratch operand']
  #allocation4 [shape = 'f32[8,32]{1,0:T(8,128)}', space=vmem, size = 0x1000, scoped, tag = 'scratch operand']
  #allocation5 [shape = 'f32[8,32]{1,0:T(8,128)}', space=vmem, size = 0x1000, scoped, tag = 'scratch operand']
  %s0 = inlined_call_operand.hbm [shape: f32[1,8,32], index: 0, kind: input, shape index: {}]
  %s1 = inlined_call_operand.hbm [shape: f32[8,8,128], index: 1, kind: input, shape index: {}]
  %s2 = inlined_call_operand.hbm [shape: bf16[32,128], index: 2, kind: input, shape index: {}]
  %s3 = inlined_call_operand.hbm [shape: bf16[64,128], index: 3, kind: input, shape index: {}]
  %s4 = inlined_call_operand.vmem [shape: f32[1,128], index: 4, kind: input, shape index: {}]
  %s5 = inlined_call_operand.hbm [shape: f32[8,8,32], index: 5, kind: output, shape index: {}]
  %s6 = sld [smem:[#allocation0]]
  $region50: #{tpu_custom_call.1} parent=0
    _
  %s8 = ssub.s32 1, %s6
  %s9 = scalar_select 0, %s8, %s6
  $region1: #{tpu_custom_call.1} parent=0
    #allocation6 [shape = 'u8[4096]{0}', space=vmem, size = 0x1000, scoped, tag = 'input window, operand 0, single buffered']
    #allocation7 [shape = 's32[1]{0}', space=sflag, size = 0x4, scoped, tag = 'scoped memory for tpu_custom_call.1']
    #allocation8 [shape = 's32[1]{0}', space=sflag, size = 0x4, scoped, tag = 'scoped memory for tpu_custom_call.1']
    #allocation9 [shape = 'u8[32768]{0}', space=vmem, size = 0x8000, scoped, tag = 'input window, operand 1, single buffered']
    #allocation10 [shape = 's32[1]{0}', space=sflag, size = 0x4, scoped, tag = 'scoped memory for tpu_custom_call.1']
    #allocation11 [shape = 'u8[8192]{0}', space=vmem, size = 0x2000, scoped, tag = 'input window, operand 2, single buffered']
    #allocation12 [shape = 'u8[16384]{0}', space=vmem, size = 0x4000, scoped, tag = 'input window, operand 3, single buffered']
    #allocation13 [shape = 's32[1]{0}', space=sflag, size = 0x4, scoped, tag = 'scoped memory for tpu_custom_call.1']
    #allocation14 [shape = 'u8[32768]{0}', space=vmem, size = 0x8000, scoped, tag = 'output window, operand 0, single buffered']
    %10 = vsyncpa [#allocation7], 0
    %11 = vsyncpa [#allocation10], 0
    %12 = vsyncpa [#allocation13], 0
    %13 = vsyncpa [#allocation8], 0
    // Predicated region
    $region2: #{tpu_custom_call.1} parent=1 // pred_check
      _
    $region3: #{tpu_custom_call.1} parent=1 // pred_check_branch
      %15 = sbr.rel (0) target = $region5
    $region4: #{tpu_custom_call.1} parent=1 // pred_region
      %s17 = ssub.s32 128, 128
      %18 = vsyncadd [#allocation7], %s17
      %s20 = sshll.u32 [#allocation6], 4
      %s21 = int_to_ptr.vmem [resolvable:$true] %s20
      %23 = dma.hbm_to_vmem [thread:$0]  %s0, 128, %s21, [#allocation7]
    $region5: #{tpu_custom_call.1} parent=1 // pred_fallthru
      _
    // Predicated region
    $region6: #{tpu_custom_call.1} parent=1 // pred_check
      _
    $region7: #{tpu_custom_call.1} parent=1 // pred_check_branch
      %25 = sbr.rel (0) target = $region9
    $region8: #{tpu_custom_call.1} parent=1 // pred_region
      %s27 = ssub.s32 1024, 1024
      %28 = vsyncadd [#allocation10], %s27
      %s29 = sshll.u32 [#allocation9], 4
      %s30 = int_to_ptr.vmem [resolvable:$true] %s29
      %35 = dma.hbm_to_vmem [thread:$0]  %s1, 1024, %s30, [#allocation10], 128, 128, 8
    $region9: #{tpu_custom_call.1} parent=1 // pred_fallthru
      _
    // Predicated region
    $region10: #{tpu_custom_call.1} parent=1 // pred_check
      _
    $region11: #{tpu_custom_call.1} parent=1 // pred_check_branch
      %37 = sbr.rel (0) target = $region13
    $region12: #{tpu_custom_call.1} parent=1 // pred_region
      %s39 = ssub.s32 256, 256
      %40 = vsyncadd [#allocation10], %s39
      %s41 = sshll.u32 [#allocation11], 4
      %s42 = int_to_ptr.vmem [resolvable:$true] %s41
      %47 = dma.hbm_to_vmem [thread:$0]  %s2, 256, %s42, [#allocation10], 64, 64, 4
    $region13: #{tpu_custom_call.1} parent=1 // pred_fallthru
      _
    // Predicated region
    $region14: #{tpu_custom_call.1} parent=1 // pred_check
      _
    $region15: #{tpu_custom_call.1} parent=1 // pred_check_branch
      %49 = sbr.rel (0) target = $region17
    $region16: #{tpu_custom_call.1} parent=1 // pred_region
      %s51 = ssub.s32 512, 512
      %52 = vsyncadd [#allocation13], %s51
      %s53 = sshll.u32 [#allocation12], 4
      %s54 = int_to_ptr.vmem [resolvable:$true] %s53
      %59 = dma.hbm_to_vmem [thread:$0]  %s3, 512, %s54, [#allocation13], 64, 64, 4
    $region17: #{tpu_custom_call.1} parent=1 // pred_fallthru
      _
    // Predicated region
    $region18: #{tpu_custom_call.1} parent=1 // pred_check
      _
    $region19: #{tpu_custom_call.1} parent=1 // pred_check_branch
      %61 = sbr.rel (0) target = $region21
    $region20: #{tpu_custom_call.1} parent=1 // pred_region
      _
    $region21: #{tpu_custom_call.1} parent=1 // pred_fallthru
      _
    // Predicated region
    $region22: #{tpu_custom_call.1} parent=1 // pred_check
      _
    $region23: #{tpu_custom_call.1} parent=1 // pred_check_branch
      %63 = sbr.rel (0) target = $region25
    $region24: #{tpu_custom_call.1} parent=1 // pred_region
      %64 = dma.done [#allocation7], 128
    $region25: #{tpu_custom_call.1} parent=1 // pred_fallthru
      _
    // Predicated region
    $region26: #{tpu_custom_call.1} parent=1 // pred_check
      _
    $region27: #{tpu_custom_call.1} parent=1 // pred_check_branch
      %66 = sbr.rel (0) target = $region29
    $region28: #{tpu_custom_call.1} parent=1 // pred_region
      %67 = dma.done [#allocation10], 1024
    $region29: #{tpu_custom_call.1} parent=1 // pred_fallthru
      _
    // Predicated region
    $region30: #{tpu_custom_call.1} parent=1 // pred_check
      _
    $region31: #{tpu_custom_call.1} parent=1 // pred_check_branch
      %69 = sbr.rel (0) target = $region33
    $region32: #{tpu_custom_call.1} parent=1 // pred_region
      %70 = dma.done [#allocation10], 256
    $region33: #{tpu_custom_call.1} parent=1 // pred_fallthru
      _
    // Predicated region
    $region34: #{tpu_custom_call.1} parent=1 // pred_check
      _
    $region35: #{tpu_custom_call.1} parent=1 // pred_check_branch
      %72 = sbr.rel (0) target = $region37
    $region36: #{tpu_custom_call.1} parent=1 // pred_region
      %73 = dma.done [#allocation13], 512
    $region37: #{tpu_custom_call.1} parent=1 // pred_fallthru
      _
    %p75 = scmp.eq.s32.totalorder 0, 0
    // Predicated region
    $region38: #{tpu_custom_call.1} parent=1 // pred_check
      %p76 = pneg %p75
    $region39: #{tpu_custom_call.1} parent=1 // pred_check_branch
      %78 = sbr.rel (%p76) target = $region41
    $region40: #{tpu_custom_call.1} parent=1 // pred_region
      %v79 = vld [vmem:[#allocation6] sm:$0xff]
      %vm80 = vcmask 261120
      %81 = vst.msk [vmem:[#allocation2] sm:$0xff] %vm80, 0.0
      %82 = vst.msk [vmem:[#allocation4] sm:$0xff] %vm80, 0.0
      %83 = vst.msk [vmem:[#allocation3] sm:$0xff] %vm80, %v79
      %84 = vst.msk [vmem:[#allocation5] sm:$0xff] %vm80, %v79
    $region41: #{tpu_custom_call.1} parent=1 // pred_fallthru
      _
    %v85 = vld [vmem:[#allocation11] sm:$0xf]
    %v86 = vld [vmem:[#allocation11 + $0x4] sm:$0xf]
    %v87 = vld [vmem:[#allocation11 + $0x8] sm:$0xf]
    %v88 = vld [vmem:[#allocation11 + $0xc] sm:$0xf]
    %v89 = vld [vmem:[#allocation12] sm:$0xf]
    %v90 = vld [vmem:[#allocation12 + $0x4] sm:$0xf]
    %v91 = vld [vmem:[#allocation12 + $0x8] sm:$0xf]
    %v92 = vld [vmem:[#allocation12 + $0xc] sm:$0xf]
    %v93 = vld [vmem:[#allocation12 + $0x10] sm:$0xf]
    %v94 = vld [vmem:[#allocation12 + $0x14] sm:$0xf]
    %v95 = vld [vmem:[#allocation12 + $0x18] sm:$0xf]
    %v96 = vld [vmem:[#allocation12 + $0x1c] sm:$0xf]
    %v97 = vld [vmem:[%s4] sm:$0x1]
    %v99 = vlaneseq
    %v100 = vshrl.u32 %v99, 7
    %v101 = vsub.s32 0, %v100
    %v102 = vrot.slane %v97, %v101
    %v104 = vld [vmem:[#allocation9] sm:$0xff]
    %v105 = vld [vmem:[#allocation2] sm:$0xff]
    %v106 = vpack.c.bf16 %v105, %v105
    %v111 = vunpack.c.l.b16 %v85
    %v112 = vunpack.c.l.b16 %v86
    %v113 = vunpack.c.l.b16 %v87
    %v114 = vunpack.c.l.b16 %v88
    %v115 = vpack.c.b16 %v112, %v111
    %v116 = vpack.c.b16 %v114, %v113
    %vm119 = vcmask 261120
    %v121 = vsel %vm119, %v106, 0
    %123 = vmatprep.subr.bf16.mxu0 0
    %124 = vmatpush1.bf16.msra.mxu0 0
    %125 = vmatprep.subr.bf16.mxu0 0
    %126 = vmatpush1.bf16.msra.mxu0 0
    %127 = vmatprep.subr.bf16.mxu0 0
    %128 = vmatpush1.bf16.msra.mxu0 0
    %129 = vmatprep.subr.bf16.mxu0 0
    %130 = vmatpush1.bf16.msra.mxu0 0
    %131 = vmatprep.subr.bf16.mxu0 0
    %132 = vmatpush1.bf16.msra.mxu0 0
    %133 = vmatprep.subr.bf16.mxu0 0
    %134 = vmatpush1.bf16.msra.mxu0 0
    %135 = vmatprep.subr.bf16.mxu0 0
    %136 = vmatpush1.bf16.msra.mxu0 %v116
    %137 = vmatprep.subr.bf16.mxu0 0
    %138 = vmatpush1.bf16.msra.mxu0 %v115
    %139 = vmatprep.subr.bf16.mxu0 0
    %140 = vmatpush2.bf16.msra.mxu0 0
    %141 = vmatprep.subr.bf16.mxu0 0
    %142 = vmatpush2.bf16.msra.mxu0 0
    %143 = vmatprep.subr.bf16.mxu0 0
    %144 = vmatpush2.bf16.msra.mxu0 0
    %145 = vmatprep.subr.bf16.mxu0 0
    %146 = vmatpush2.bf16.msra.mxu0 0
    %147 = vmatprep.subr.bf16.mxu0 0
    %148 = vmatpush2.bf16.msra.mxu0 0
    %149 = vmatprep.subr.bf16.mxu0 0
    %150 = vmatpush2.bf16.msra.mxu0 0
    %151 = vmatprep.subr.bf16.mxu0 0
    %152 = vmatpush2.bf16.msra.mxu0 0
    %153 = vmatprep.subr.bf16.mxu0 0
    %154 = vmatpush2.bf16.msra.mxu0 0
    %155 = vmatprep.mubr.bf16.mxu0 0
    %156 = vmatmul.mubr.bf16.gmra.mxu0 %v121
    %v157 = vpop.f32.mrf.mxu0
    %v158 = vadd.f32 0.0, %v157
    %v159 = vpop.f32.mrf.mxu0
    %v160 = vpop.f32.mrf.mxu0
    %v161 = vpop.f32.mrf.mxu0
    %162 = vdwg.mxu0
    %v163 = vadd.f32 %v104, %v158
    %v164 = vld [vmem:[#allocation3] sm:$0xff]
    %v165 = vxor.u32 %v163, 2147483648
    %v166 = vmul.f32 %v165, 1.442695
    %v167 = vpow.pop %v166
    %v168 = vadd.f32 %v167, 1.0
    %v169 = vrcp.pop %v168
    %v170 = vmul.f32 1.0, %v169
    %v171 = vtanh.pop %v163
    %173 = vrot.lane.b32.xlu0 %v164, 32
    %v174 = vpop.permute.xlu0 %173
    %v176 = vmul.f32 %v170, %v174
    %178 = vrot.lane.b32.xlu0 %v171, 32
    %v179 = vpop.permute.xlu0 %178
    %v181 = vmul.f32 %v170, %v179
    %183 = vrot.lane.b32.xlu0 %v181, 32
    %v184 = vpop.permute.xlu0 %183
    %v186 = vadd.f32 %v176, %v184
    %v187 = vtanh.pop %v186
    %189 = vrot.lane.b32.xlu0 %v187, 32
    %v190 = vpop.permute.xlu0 %189
    %v192 = vmul.f32 %v170, %v190
    %194 = vrot.lane.b32.xlu0 %v192, 64
    %v195 = vpop.permute.xlu0 %194
    %197 = vst.msk [vmem:[#allocation2] sm:$0xff] %vm119, %v195
    %199 = vrot.lane.b32.xlu0 %v186, 96
    %v200 = vpop.permute.xlu0 %199
    %202 = vst.msk [vmem:[#allocation3] sm:$0xff] %vm119, %v200
    %v203 = vld [vmem:[#allocation4] sm:$0xff]
    %205 = vrot.lane.b32.xlu0 %v203, 32
    %v206 = vpop.permute.xlu0 %205
    %v208 = vsel %vm119, %v195, %v206
    %v209 = vpack.c.bf16 %v208, %v208
    %v218 = vunpack.c.l.b16 %v89
    %v219 = vunpack.c.l.b16 %v90
    %v220 = vunpack.c.l.b16 %v91
    %v221 = vunpack.c.l.b16 %v92
    %v222 = vunpack.c.l.b16 %v93
    %v223 = vunpack.c.l.b16 %v94
    %v224 = vunpack.c.l.b16 %v95
    %v225 = vunpack.c.l.b16 %v96
    %v226 = vpack.c.b16 %v219, %v218
    %v227 = vpack.c.b16 %v221, %v220
    %v228 = vpack.c.b16 %v223, %v222
    %v229 = vpack.c.b16 %v225, %v224
    %vm234 = vcmask 523264
    %v236 = vsel %vm234, %v209, 0
    %238 = vmatprep.subr.bf16.mxu0 0
    %239 = vmatpush1.bf16.msra.mxu0 0
    %240 = vmatprep.subr.bf16.mxu0 0
    %241 = vmatpush1.bf16.msra.mxu0 0
    %242 = vmatprep.subr.bf16.mxu0 0
    %243 = vmatpush1.bf16.msra.mxu0 0
    %244 = vmatprep.subr.bf16.mxu0 0
    %245 = vmatpush1.bf16.msra.mxu0 0
    %246 = vmatprep.subr.bf16.mxu0 0
    %247 = vmatpush1.bf16.msra.mxu0 %v229
    %248 = vmatprep.subr.bf16.mxu0 0
    %249 = vmatpush1.bf16.msra.mxu0 %v228
    %250 = vmatprep.subr.bf16.mxu0 0
    %251 = vmatpush1.bf16.msra.mxu0 %v227
    %252 = vmatprep.subr.bf16.mxu0 0
    %253 = vmatpush1.bf16.msra.mxu0 %v226
    %254 = vmatprep.subr.bf16.mxu0 0
    %255 = vmatpush2.bf16.msra.mxu0 0
    %256 = vmatprep.subr.bf16.mxu0 0
    %257 = vmatpush2.bf16.msra.mxu0 0
    %258 = vmatprep.subr.bf16.mxu0 0
    %259 = vmatpush2.bf16.msra.mxu0 0
    %260 = vmatprep.subr.bf16.mxu0 0
    %261 = vmatpush2.bf16.msra.mxu0 0
    %262 = vmatprep.subr.bf16.mxu0 0
    %263 = vmatpush2.bf16.msra.mxu0 0
    %264 = vmatprep.subr.bf16.mxu0 0
    %265 = vmatpush2.bf16.msra.mxu0 0
    %266 = vmatprep.subr.bf16.mxu0 0
    %267 = vmatpush2.bf16.msra.mxu0 0
    %268 = vmatprep.subr.bf16.mxu0 0
    %269 = vmatpush2.bf16.msra.mxu0 0
    %270 = vmatprep.mubr.bf16.mxu0 0
    %271 = vmatmul.mubr.bf16.gmra.mxu0 %v236
    %v272 = vpop.f32.mrf.mxu0
    %v273 = vadd.f32 %v102, %v272
    %v274 = vpop.f32.mrf.mxu0
    %v275 = vpop.f32.mrf.mxu0
    %v276 = vpop.f32.mrf.mxu0
    %277 = vdwg.mxu0
    %v278 = vld [vmem:[#allocation5] sm:$0xff]
    %v279 = vxor.u32 %v273, 2147483648
    %v280 = vmul.f32 %v279, 1.442695
    %v281 = vpow.pop %v280
    %v282 = vadd.f32 %v281, 1.0
    %v283 = vrcp.pop %v282
    %v284 = vmul.f32 1.0, %v283
    %v285 = vtanh.pop %v273
    %287 = vrot.lane.b32.xlu0 %v278, 32
    %v288 = vpop.permute.xlu0 %287
    %v290 = vmul.f32 %v284, %v288
    %292 = vrot.lane.b32.xlu0 %v285, 32
    %v293 = vpop.permute.xlu0 %292
    %v295 = vmul.f32 %v284, %v293
    %297 = vrot.lane.b32.xlu0 %v295, 32
    %v298 = vpop.permute.xlu0 %297
    %v300 = vadd.f32 %v290, %v298
    %v301 = vtanh.pop %v300
    %303 = vrot.lane.b32.xlu0 %v301, 32
    %v304 = vpop.permute.xlu0 %303
    %v306 = vmul.f32 %v284, %v304
    %308 = vrot.lane.b32.xlu0 %v306, 64
    %v309 = vpop.permute.xlu0 %308
    %311 = vst.msk [vmem:[#allocation4] sm:$0xff] %vm119, %v309
    %313 = vrot.lane.b32.xlu0 %v300, 96
    %v314 = vpop.permute.xlu0 %313
    %316 = vst.msk [vmem:[#allocation5] sm:$0xff] %vm119, %v314
    %317 = vst.msk [vmem:[#allocation14] sm:$0xff] %vm119, %v309
    %s318 = scalar_lea.vmem [#allocation9], 8
    %v319 = vld [vmem:[%s318] sm:$0xff]
    %v320 = vld [vmem:[#allocation2] sm:$0xff]
    %v321 = vpack.c.bf16 %v320, %v320
    %v323 = vsel %vm119, %v321, 0
    %325 = vmatprep.subr.bf16.mxu0 0
    %326 = vmatpush1.bf16.msra.mxu0 0
    %327 = vmatprep.subr.bf16.mxu0 0
    %328 = vmatpush1.bf16.msra.mxu0 0
    %329 = vmatprep.subr.bf16.mxu0 0
    %330 = vmatpush1.bf16.msra.mxu0 0
    %331 = vmatprep.subr.bf16.mxu0 0
    %332 = vmatpush1.bf16.msra.mxu0 0
    %333 = vmatprep.subr.bf16.mxu0 0
    %334 = vmatpush1.bf16.msra.mxu0 0
    %335 = vmatprep.subr.bf16.mxu0 0
    %336 = vmatpush1.bf16.msra.mxu0 0
    %337 = vmatprep.subr.bf16.mxu0 0
    %338 = vmatpush1.bf16.msra.mxu0 %v116
    %339 = vmatprep.subr.bf16.mxu0 0
    %340 = vmatpush1.bf16.msra.mxu0 %v115
    %341 = vmatprep.subr.bf16.mxu0 0
    %342 = vmatpush2.bf16.msra.mxu0 0
    %343 = vmatprep.subr.bf16.mxu0 0
    %344 = vmatpush2.bf16.msra.mxu0 0
    %345 = vmatprep.subr.bf16.mxu0 0
    %346 = vmatpush2.bf16.msra.mxu0 0
    %347 = vmatprep.subr.bf16.mxu0 0
    %348 = vmatpush2.bf16.msra.mxu0 0
    %349 = vmatprep.subr.bf16.mxu0 0
    %350 = vmatpush2.bf16.msra.mxu0 0
    %351 = vmatprep.subr.bf16.mxu0 0
    %352 = vmatpush2.bf16.msra.mxu0 0
    %353 = vmatprep.subr.bf16.mxu0 0
    %354 = vmatpush2.bf16.msra.mxu0 0
    %355 = vmatprep.subr.bf16.mxu0 0
    %356 = vmatpush2.bf16.msra.mxu0 0
    %357 = vmatprep.mubr.bf16.mxu0 0
    %358 = vmatmul.mubr.bf16.gmra.mxu0 %v323
    %v359 = vpop.f32.mrf.mxu0
    %v360 = vadd.f32 0.0, %v359
    %v361 = vpop.f32.mrf.mxu0
    %v362 = vpop.f32.mrf.mxu0
    %v363 = vpop.f32.mrf.mxu0
    %364 = vdwg.mxu0
    %v365 = vadd.f32 %v319, %v360
    %v366 = vld [vmem:[#allocation3] sm:$0xff]
    %v367 = vxor.u32 %v365, 2147483648
    %v368 = vmul.f32 %v367, 1.442695
    %v369 = vpow.pop %v368
    %v370 = vadd.f32 %v369, 1.0
    %v371 = vrcp.pop %v370
    %v372 = vmul.f32 1.0, %v371
    %v373 = vtanh.pop %v365
    %375 = vrot.lane.b32.xlu0 %v366, 32
    %v376 = vpop.permute.xlu0 %375
    %v378 = vmul.f32 %v372, %v376
    %380 = vrot.lane.b32.xlu0 %v373, 32
    %v381 = vpop.permute.xlu0 %380
    %v383 = vmul.f32 %v372, %v381
    %385 = vrot.lane.b32.xlu0 %v383, 32
    %v386 = vpop.permute.xlu0 %385
    %v388 = vadd.f32 %v378, %v386
    %v389 = vtanh.pop %v388
    %391 = vrot.lane.b32.xlu0 %v389, 32
    %v392 = vpop.permute.xlu0 %391
    %v394 = vmul.f32 %v372, %v392
    %396 = vrot.lane.b32.xlu0 %v394, 64
    %v397 = vpop.permute.xlu0 %396
    %399 = vst.msk [vmem:[#allocation2] sm:$0xff] %vm119, %v397
    %401 = vrot.lane.b32.xlu0 %v388, 96
    %v402 = vpop.permute.xlu0 %401
    %404 = vst.msk [vmem:[#allocation3] sm:$0xff] %vm119, %v402
    %v405 = vld [vmem:[#allocation4] sm:$0xff]
    %407 = vrot.lane.b32.xlu0 %v405, 32
    %v408 = vpop.permute.xlu0 %407
    %v410 = vsel %vm119, %v397, %v408
    %v411 = vpack.c.bf16 %v410, %v410
    %v413 = vsel %vm234, %v411, 0
    %415 = vmatprep.subr.bf16.mxu0 0
    %416 = vmatpush1.bf16.msra.mxu0 0
    %417 = vmatprep.subr.bf16.mxu0 0
    %418 = vmatpush1.bf16.msra.mxu0 0
    %419 = vmatprep.subr.bf16.mxu0 0
    %420 = vmatpush1.bf16.msra.mxu0 0
    %421 = vmatprep.subr.bf16.mxu0 0
    %422 = vmatpush1.bf16.msra.mxu0 0
    %423 = vmatprep.subr.bf16.mxu0 0
    %424 = vmatpush1.bf16.msra.mxu0 %v229
    %425 = vmatprep.subr.bf16.mxu0 0
    %426 = vmatpush1.bf16.msra.mxu0 %v228
    %427 = vmatprep.subr.bf16.mxu0 0
    %428 = vmatpush1.bf16.msra.mxu0 %v227
    %429 = vmatprep.subr.bf16.mxu0 0
    %430 = vmatpush1.bf16.msra.mxu0 %v226
    %431 = vmatprep.subr.bf16.mxu0 0
    %432 = vmatpush2.bf16.msra.mxu0 0
    %433 = vmatprep.subr.bf16.mxu0 0
    %434 = vmatpush2.bf16.msra.mxu0 0
    %435 = vmatprep.subr.bf16.mxu0 0
    %436 = vmatpush2.bf16.msra.mxu0 0
    %437 = vmatprep.subr.bf16.mxu0 0
    %438 = vmatpush2.bf16.msra.mxu0 0
    %439 = vmatprep.subr.bf16.mxu0 0
    %440 = vmatpush2.bf16.msra.mxu0 0
    %441 = vmatprep.subr.bf16.mxu0 0
    %442 = vmatpush2.bf16.msra.mxu0 0
    %443 = vmatprep.subr.bf16.mxu0 0
    %444 = vmatpush2.bf16.msra.mxu0 0
    %445 = vmatprep.subr.bf16.mxu0 0
    %446 = vmatpush2.bf16.msra.mxu0 0
    %447 = vmatprep.mubr.bf16.mxu0 0
    %448 = vmatmul.mubr.bf16.gmra.mxu0 %v413
    %v449 = vpop.f32.mrf.mxu0
    %v450 = vadd.f32 %v102, %v449
    %v451 = vpop.f32.mrf.mxu0
    %v452 = vpop.f32.mrf.mxu0
    %v453 = vpop.f32.mrf.mxu0
    %454 = vdwg.mxu0
    %v455 = vld [vmem:[#allocation5] sm:$0xff]
    %v456 = vxor.u32 %v450, 2147483648
    %v457 = vmul.f32 %v456, 1.442695
    %v458 = vpow.pop %v457
    %v459 = vadd.f32 %v458, 1.0
    %v460 = vrcp.pop %v459
    %v461 = vmul.f32 1.0, %v460
    %v462 = vtanh.pop %v450
    %464 = vrot.lane.b32.xlu0 %v455, 32
    %v465 = vpop.permute.xlu0 %464
    %v467 = vmul.f32 %v461, %v465
    %469 = vrot.lane.b32.xlu0 %v462, 32
    %v470 = vpop.permute.xlu0 %469
    %v472 = vmul.f32 %v461, %v470
    %474 = vrot.lane.b32.xlu0 %v472, 32
    %v475 = vpop.permute.xlu0 %474
    %v477 = vadd.f32 %v467, %v475
    %v478 = vtanh.pop %v477
    %480 = vrot.lane.b32.xlu0 %v478, 32
    %v481 = vpop.permute.xlu0 %480
    %v483 = vmul.f32 %v461, %v481
    %485 = vrot.lane.b32.xlu0 %v483, 64
    %v486 = vpop.permute.xlu0 %485
    %488 = vst.msk [vmem:[#allocation4] sm:$0xff] %vm119, %v486
    %490 = vrot.lane.b32.xlu0 %v477, 96
    %v491 = vpop.permute.xlu0 %490
    %493 = vst.msk [vmem:[#allocation5] sm:$0xff] %vm119, %v491
    %s494 = scalar_lea.vmem [#allocation14], 8
    %495 = vst.msk [vmem:[%s494] sm:$0xff] %vm119, %v486
    %s496 = scalar_lea.vmem [#allocation9], 16
    %v497 = vld [vmem:[%s496] sm:$0xff]
    %v498 = vld [vmem:[#allocation2] sm:$0xff]
    %v499 = vpack.c.bf16 %v498, %v498
    %v501 = vsel %vm119, %v499, 0
    %503 = vmatprep.subr.bf16.mxu0 0
    %504 = vmatpush1.bf16.msra.mxu0 0
    %505 = vmatprep.subr.bf16.mxu0 0
    %506 = vmatpush1.bf16.msra.mxu0 0
    %507 = vmatprep.subr.bf16.mxu0 0
    %508 = vmatpush1.bf16.msra.mxu0 0
    %509 = vmatprep.subr.bf16.mxu0 0
    %510 = vmatpush1.bf16.msra.mxu0 0
    %511 = vmatprep.subr.bf16.mxu0 0
    %512 = vmatpush1.bf16.msra.mxu0 0
    %513 = vmatprep.subr.bf16.mxu0 0
    %514 = vmatpush1.bf16.msra.mxu0 0
    %515 = vmatprep.subr.bf16.mxu0 0
    %516 = vmatpush1.bf16.msra.mxu0 %v116
    %517 = vmatprep.subr.bf16.mxu0 0
    %518 = vmatpush1.bf16.msra.mxu0 %v115
    %519 = vmatprep.subr.bf16.mxu0 0
    %520 = vmatpush2.bf16.msra.mxu0 0
    %521 = vmatprep.subr.bf16.mxu0 0
    %522 = vmatpush2.bf16.msra.mxu0 0
    %523 = vmatprep.subr.bf16.mxu0 0
    %524 = vmatpush2.bf16.msra.mxu0 0
    %525 = vmatprep.subr.bf16.mxu0 0
    %526 = vmatpush2.bf16.msra.mxu0 0
    %527 = vmatprep.subr.bf16.mxu0 0
    %528 = vmatpush2.bf16.msra.mxu0 0
    %529 = vmatprep.subr.bf16.mxu0 0
    %530 = vmatpush2.bf16.msra.mxu0 0
    %531 = vmatprep.subr.bf16.mxu0 0
    %532 = vmatpush2.bf16.msra.mxu0 0
    %533 = vmatprep.subr.bf16.mxu0 0
    %534 = vmatpush2.bf16.msra.mxu0 0
    %535 = vmatprep.mubr.bf16.mxu0 0
    %536 = vmatmul.mubr.bf16.gmra.mxu0 %v501
    %v537 = vpop.f32.mrf.mxu0
    %v538 = vadd.f32 0.0, %v537
    %v539 = vpop.f32.mrf.mxu0
    %v540 = vpop.f32.mrf.mxu0
    %v541 = vpop.f32.mrf.mxu0
    %542 = vdwg.mxu0
    %v543 = vadd.f32 %v497, %v538
    %v544 = vld [vmem:[#allocation3] sm:$0xff]
    %v545 = vxor.u32 %v543, 2147483648
    %v546 = vmul.f32 %v545, 1.442695
    %v547 = vpow.pop %v546
    %v548 = vadd.f32 %v547, 1.0
    %v549 = vrcp.pop %v548
    %v550 = vmul.f32 1.0, %v549
    %v551 = vtanh.pop %v543
    %553 = vrot.lane.b32.xlu0 %v544, 32
    %v554 = vpop.permute.xlu0 %553
    %v556 = vmul.f32 %v550, %v554
    %558 = vrot.lane.b32.xlu0 %v551, 32
    %v559 = vpop.permute.xlu0 %558
    %v561 = vmul.f32 %v550, %v559
    %563 = vrot.lane.b32.xlu0 %v561, 32
    %v564 = vpop.permute.xlu0 %563
    %v566 = vadd.f32 %v556, %v564
    %v567 = vtanh.pop %v566
    %569 = vrot.lane.b32.xlu0 %v567, 32
    %v570 = vpop.permute.xlu0 %569
    %v572 = vmul.f32 %v550, %v570
    %574 = vrot.lane.b32.xlu0 %v572, 64
    %v575 = vpop.permute.xlu0 %574
    %577 = vst.msk [vmem:[#allocation2] sm:$0xff] %vm119, %v575
    %579 = vrot.lane.b32.xlu0 %v566, 96
    %v580 = vpop.permute.xlu0 %579
    %582 = vst.msk [vmem:[#allocation3] sm:$0xff] %vm119, %v580
    %v583 = vld [vmem:[#allocation4] sm:$0xff]
    %585 = vrot.lane.b32.xlu0 %v583, 32
    %v586 = vpop.permute.xlu0 %585
    %v588 = vsel %vm119, %v575, %v586
    %v589 = vpack.c.bf16 %v588, %v588
    %v591 = vsel %vm234, %v589, 0
    %593 = vmatprep.subr.bf16.mxu0 0
    %594 = vmatpush1.bf16.msra.mxu0 0
    %595 = vmatprep.subr.bf16.mxu0 0
    %596 = vmatpush1.bf16.msra.mxu0 0
    %597 = vmatprep.subr.bf16.mxu0 0
    %598 = vmatpush1.bf16.msra.mxu0 0
    %599 = vmatprep.subr.bf16.mxu0 0
    %600 = vmatpush1.bf16.msra.mxu0 0
    %601 = vmatprep.subr.bf16.mxu0 0
    %602 = vmatpush1.bf16.msra.mxu0 %v229
    %603 = vmatprep.subr.bf16.mxu0 0
    %604 = vmatpush1.bf16.msra.mxu0 %v228
    %605 = vmatprep.subr.bf16.mxu0 0
    %606 = vmatpush1.bf16.msra.mxu0 %v227
    %607 = vmatprep.subr.bf16.mxu0 0
    %608 = vmatpush1.bf16.msra.mxu0 %v226
    %609 = vmatprep.subr.bf16.mxu0 0
    %610 = vmatpush2.bf16.msra.mxu0 0
    %611 = vmatprep.subr.bf16.mxu0 0
    %612 = vmatpush2.bf16.msra.mxu0 0
    %613 = vmatprep.subr.bf16.mxu0 0
    %614 = vmatpush2.bf16.msra.mxu0 0
    %615 = vmatprep.subr.bf16.mxu0 0
    %616 = vmatpush2.bf16.msra.mxu0 0
    %617 = vmatprep.subr.bf16.mxu0 0
    %618 = vmatpush2.bf16.msra.mxu0 0
    %619 = vmatprep.subr.bf16.mxu0 0
    %620 = vmatpush2.bf16.msra.mxu0 0
    %621 = vmatprep.subr.bf16.mxu0 0
    %622 = vmatpush2.bf16.msra.mxu0 0
    %623 = vmatprep.subr.bf16.mxu0 0
    %624 = vmatpush2.bf16.msra.mxu0 0
    %625 = vmatprep.mubr.bf16.mxu0 0
    %626 = vmatmul.mubr.bf16.gmra.mxu0 %v591
    %v627 = vpop.f32.mrf.mxu0
    %v628 = vadd.f32 %v102, %v627
    %v629 = vpop.f32.mrf.mxu0
    %v630 = vpop.f32.mrf.mxu0
    %v631 = vpop.f32.mrf.mxu0
    %632 = vdwg.mxu0
    %v633 = vld [vmem:[#allocation5] sm:$0xff]
    %v634 = vxor.u32 %v628, 2147483648
    %v635 = vmul.f32 %v634, 1.442695
    %v636 = vpow.pop %v635
    %v637 = vadd.f32 %v636, 1.0
    %v638 = vrcp.pop %v637
    %v639 = vmul.f32 1.0, %v638
    %v640 = vtanh.pop %v628
    %642 = vrot.lane.b32.xlu0 %v633, 32
    %v643 = vpop.permute.xlu0 %642
    %v645 = vmul.f32 %v639, %v643
    %647 = vrot.lane.b32.xlu0 %v640, 32
    %v648 = vpop.permute.xlu0 %647
    %v650 = vmul.f32 %v639, %v648
    %652 = vrot.lane.b32.xlu0 %v650, 32
    %v653 = vpop.permute.xlu0 %652
    %v655 = vadd.f32 %v645, %v653
    %v656 = vtanh.pop %v655
    %658 = vrot.lane.b32.xlu0 %v656, 32
    %v659 = vpop.permute.xlu0 %658
    %v661 = vmul.f32 %v639, %v659
    %663 = vrot.lane.b32.xlu0 %v661, 64
    %v664 = vpop.permute.xlu0 %663
    %666 = vst.msk [vmem:[#allocation4] sm:$0xff] %vm119, %v664
    %668 = vrot.lane.b32.xlu0 %v655, 96
    %v669 = vpop.permute.xlu0 %668
    %671 = vst.msk [vmem:[#allocation5] sm:$0xff] %vm119, %v669
    %s672 = scalar_lea.vmem [#allocation14], 16
    %673 = vst.msk [vmem:[%s672] sm:$0xff] %vm119, %v664
    %s674 = scalar_lea.vmem [#allocation9], 24
    %v675 = vld [vmem:[%s674] sm:$0xff]
    %v676 = vld [vmem:[#allocation2] sm:$0xff]
    %v677 = vpack.c.bf16 %v676, %v676
    %v679 = vsel %vm119, %v677, 0
    %681 = vmatprep.subr.bf16.mxu0 0
    %682 = vmatpush1.bf16.msra.mxu0 0
    %683 = vmatprep.subr.bf16.mxu0 0
    %684 = vmatpush1.bf16.msra.mxu0 0
    %685 = vmatprep.subr.bf16.mxu0 0
    %686 = vmatpush1.bf16.msra.mxu0 0
    %687 = vmatprep.subr.bf16.mxu0 0
    %688 = vmatpush1.bf16.msra.mxu0 0
    %689 = vmatprep.subr.bf16.mxu0 0
    %690 = vmatpush1.bf16.msra.mxu0 0
    %691 = vmatprep.subr.bf16.mxu0 0
    %692 = vmatpush1.bf16.msra.mxu0 0
    %693 = vmatprep.subr.bf16.mxu0 0
    %694 = vmatpush1.bf16.msra.mxu0 %v116
    %695 = vmatprep.subr.bf16.mxu0 0
    %696 = vmatpush1.bf16.msra.mxu0 %v115
    %697 = vmatprep.subr.bf16.mxu0 0
    %698 = vmatpush2.bf16.msra.mxu0 0
    %699 = vmatprep.subr.bf16.mxu0 0
    %700 = vmatpush2.bf16.msra.mxu0 0
    %701 = vmatprep.subr.bf16.mxu0 0
    %702 = vmatpush2.bf16.msra.mxu0 0
    %703 = vmatprep.subr.bf16.mxu0 0
    %704 = vmatpush2.bf16.msra.mxu0 0
    %705 = vmatprep.subr.bf16.mxu0 0
    %706 = vmatpush2.bf16.msra.mxu0 0
    %707 = vmatprep.subr.bf16.mxu0 0
    %708 = vmatpush2.bf16.msra.mxu0 0
    %709 = vmatprep.subr.bf16.mxu0 0
    %710 = vmatpush2.bf16.msra.mxu0 0
    %711 = vmatprep.subr.bf16.mxu0 0
    %712 = vmatpush2.bf16.msra.mxu0 0
    %713 = vmatprep.mubr.bf16.mxu0 0
    %714 = vmatmul.mubr.bf16.gmra.mxu0 %v679
    %v715 = vpop.f32.mrf.mxu0
    %v716 = vadd.f32 0.0, %v715
    %v717 = vpop.f32.mrf.mxu0
    %v718 = vpop.f32.mrf.mxu0
    %v719 = vpop.f32.mrf.mxu0
    %720 = vdwg.mxu0
    %v721 = vadd.f32 %v675, %v716
    %v722 = vld [vmem:[#allocation3] sm:$0xff]
    %v723 = vxor.u32 %v721, 2147483648
    %v724 = vmul.f32 %v723, 1.442695
    %v725 = vpow.pop %v724
    %v726 = vadd.f32 %v725, 1.0
    %v727 = vrcp.pop %v726
    %v728 = vmul.f32 1.0, %v727
    %v729 = vtanh.pop %v721
    %731 = vrot.lane.b32.xlu0 %v722, 32
    %v732 = vpop.permute.xlu0 %731
    %v734 = vmul.f32 %v728, %v732
    %736 = vrot.lane.b32.xlu0 %v729, 32
    %v737 = vpop.permute.xlu0 %736
    %v739 = vmul.f32 %v728, %v737
    %741 = vrot.lane.b32.xlu0 %v739, 32
    %v742 = vpop.permute.xlu0 %741
    %v744 = vadd.f32 %v734, %v742
    %v745 = vtanh.pop %v744
    %747 = vrot.lane.b32.xlu0 %v745, 32
    %v748 = vpop.permute.xlu0 %747
    %v750 = vmul.f32 %v728, %v748
    %752 = vrot.lane.b32.xlu0 %v750, 64
    %v753 = vpop.permute.xlu0 %752
    %755 = vst.msk [vmem:[#allocation2] sm:$0xff] %vm119, %v753
    %757 = vrot.lane.b32.xlu0 %v744, 96
    %v758 = vpop.permute.xlu0 %757
    %760 = vst.msk [vmem:[#allocation3] sm:$0xff] %vm119, %v758
    %v761 = vld [vmem:[#allocation4] sm:$0xff]
    %763 = vrot.lane.b32.xlu0 %v761, 32
    %v764 = vpop.permute.xlu0 %763
    %v766 = vsel %vm119, %v753, %v764
    %v767 = vpack.c.bf16 %v766, %v766
    %v769 = vsel %vm234, %v767, 0
    %771 = vmatprep.subr.bf16.mxu0 0
    %772 = vmatpush1.bf16.msra.mxu0 0
    %773 = vmatprep.subr.bf16.mxu0 0
    %774 = vmatpush1.bf16.msra.mxu0 0
    %775 = vmatprep.subr.bf16.mxu0 0
    %776 = vmatpush1.bf16.msra.mxu0 0
    %777 = vmatprep.subr.bf16.mxu0 0
    %778 = vmatpush1.bf16.msra.mxu0 0
    %779 = vmatprep.subr.bf16.mxu0 0
    %780 = vmatpush1.bf16.msra.mxu0 %v229
    %781 = vmatprep.subr.bf16.mxu0 0
    %782 = vmatpush1.bf16.msra.mxu0 %v228
    %783 = vmatprep.subr.bf16.mxu0 0
    %784 = vmatpush1.bf16.msra.mxu0 %v227
    %785 = vmatprep.subr.bf16.mxu0 0
    %786 = vmatpush1.bf16.msra.mxu0 %v226
    %787 = vmatprep.subr.bf16.mxu0 0
    %788 = vmatpush2.bf16.msra.mxu0 0
    %789 = vmatprep.subr.bf16.mxu0 0
    %790 = vmatpush2.bf16.msra.mxu0 0
    %791 = vmatprep.subr.bf16.mxu0 0
    %792 = vmatpush2.bf16.msra.mxu0 0
    %793 = vmatprep.subr.bf16.mxu0 0
    %794 = vmatpush2.bf16.msra.mxu0 0
    %795 = vmatprep.subr.bf16.mxu0 0
    %796 = vmatpush2.bf16.msra.mxu0 0
    %797 = vmatprep.subr.bf16.mxu0 0
    %798 = vmatpush2.bf16.msra.mxu0 0
    %799 = vmatprep.subr.bf16.mxu0 0
    %800 = vmatpush2.bf16.msra.mxu0 0
    %801 = vmatprep.subr.bf16.mxu0 0
    %802 = vmatpush2.bf16.msra.mxu0 0
    %803 = vmatprep.mubr.bf16.mxu0 0
    %804 = vmatmul.mubr.bf16.gmra.mxu0 %v769
    %v805 = vpop.f32.mrf.mxu0
    %v806 = vadd.f32 %v102, %v805
    %v807 = vpop.f32.mrf.mxu0
    %v808 = vpop.f32.mrf.mxu0
    %v809 = vpop.f32.mrf.mxu0
    %810 = vdwg.mxu0
    %v811 = vld [vmem:[#allocation5] sm:$0xff]
    %v812 = vxor.u32 %v806, 2147483648
    %v813 = vmul.f32 %v812, 1.442695
    %v814 = vpow.pop %v813
    %v815 = vadd.f32 %v814, 1.0
    %v816 = vrcp.pop %v815
    %v817 = vmul.f32 1.0, %v816
    %v818 = vtanh.pop %v806
    %820 = vrot.lane.b32.xlu0 %v811, 32
    %v821 = vpop.permute.xlu0 %820
    %v823 = vmul.f32 %v817, %v821
    %825 = vrot.lane.b32.xlu0 %v818, 32
    %v826 = vpop.permute.xlu0 %825
    %v828 = vmul.f32 %v817, %v826
    %830 = vrot.lane.b32.xlu0 %v828, 32
    %v831 = vpop.permute.xlu0 %830
    %v833 = vadd.f32 %v823, %v831
    %v834 = vtanh.pop %v833
    %836 = vrot.lane.b32.xlu0 %v834, 32
    %v837 = vpop.permute.xlu0 %836
    %v839 = vmul.f32 %v817, %v837
    %841 = vrot.lane.b32.xlu0 %v839, 64
    %v842 = vpop.permute.xlu0 %841
    %844 = vst.msk [vmem:[#allocation4] sm:$0xff] %vm119, %v842
    %846 = vrot.lane.b32.xlu0 %v833, 96
    %v847 = vpop.permute.xlu0 %846
    %849 = vst.msk [vmem:[#allocation5] sm:$0xff] %vm119, %v847
    %s850 = scalar_lea.vmem [#allocation14], 24
    %851 = vst.msk [vmem:[%s850] sm:$0xff] %vm119, %v842
    %s852 = scalar_lea.vmem [#allocation9], 32
    %v853 = vld [vmem:[%s852] sm:$0xff]
    %v854 = vld [vmem:[#allocation2] sm:$0xff]
    %v855 = vpack.c.bf16 %v854, %v854
    %v857 = vsel %vm119, %v855, 0
    %859 = vmatprep.subr.bf16.mxu0 0
    %860 = vmatpush1.bf16.msra.mxu0 0
    %861 = vmatprep.subr.bf16.mxu0 0
    %862 = vmatpush1.bf16.msra.mxu0 0
    %863 = vmatprep.subr.bf16.mxu0 0
    %864 = vmatpush1.bf16.msra.mxu0 0
    %865 = vmatprep.subr.bf16.mxu0 0
    %866 = vmatpush1.bf16.msra.mxu0 0
    %867 = vmatprep.subr.bf16.mxu0 0
    %868 = vmatpush1.bf16.msra.mxu0 0
    %869 = vmatprep.subr.bf16.mxu0 0
    %870 = vmatpush1.bf16.msra.mxu0 0
    %871 = vmatprep.subr.bf16.mxu0 0
    %872 = vmatpush1.bf16.msra.mxu0 %v116
    %873 = vmatprep.subr.bf16.mxu0 0
    %874 = vmatpush1.bf16.msra.mxu0 %v115
    %875 = vmatprep.subr.bf16.mxu0 0
    %876 = vmatpush2.bf16.msra.mxu0 0
    %877 = vmatprep.subr.bf16.mxu0 0
    %878 = vmatpush2.bf16.msra.mxu0 0
    %879 = vmatprep.subr.bf16.mxu0 0
    %880 = vmatpush2.bf16.msra.mxu0 0
    %881 = vmatprep.subr.bf16.mxu0 0
    %882 = vmatpush2.bf16.msra.mxu0 0
    %883 = vmatprep.subr.bf16.mxu0 0
    %884 = vmatpush2.bf16.msra.mxu0 0
    %885 = vmatprep.subr.bf16.mxu0 0
    %886 = vmatpush2.bf16.msra.mxu0 0
    %887 = vmatprep.subr.bf16.mxu0 0
    %888 = vmatpush2.bf16.msra.mxu0 0
    %889 = vmatprep.subr.bf16.mxu0 0
    %890 = vmatpush2.bf16.msra.mxu0 0
    %891 = vmatprep.mubr.bf16.mxu0 0
    %892 = vmatmul.mubr.bf16.gmra.mxu0 %v857
    %v893 = vpop.f32.mrf.mxu0
    %v894 = vadd.f32 0.0, %v893
    %v895 = vpop.f32.mrf.mxu0
    %v896 = vpop.f32.mrf.mxu0
    %v897 = vpop.f32.mrf.mxu0
    %898 = vdwg.mxu0
    %v899 = vadd.f32 %v853, %v894
    %v900 = vld [vmem:[#allocation3] sm:$0xff]
    %v901 = vxor.u32 %v899, 2147483648
    %v902 = vmul.f32 %v901, 1.442695
    %v903 = vpow.pop %v902
    %v904 = vadd.f32 %v903, 1.0
    %v905 = vrcp.pop %v904
    %v906 = vmul.f32 1.0, %v905
    %v907 = vtanh.pop %v899
    %909 = vrot.lane.b32.xlu0 %v900, 32
    %v910 = vpop.permute.xlu0 %909
    %v912 = vmul.f32 %v906, %v910
    %914 = vrot.lane.b32.xlu0 %v907, 32
    %v915 = vpop.permute.xlu0 %914
    %v917 = vmul.f32 %v906, %v915
    %919 = vrot.lane.b32.xlu0 %v917, 32
    %v920 = vpop.permute.xlu0 %919
    %v922 = vadd.f32 %v912, %v920
    %v923 = vtanh.pop %v922
    %925 = vrot.lane.b32.xlu0 %v923, 32
    %v926 = vpop.permute.xlu0 %925
    %v928 = vmul.f32 %v906, %v926
    %930 = vrot.lane.b32.xlu0 %v928, 64
    %v931 = vpop.permute.xlu0 %930
    %933 = vst.msk [vmem:[#allocation2] sm:$0xff] %vm119, %v931
    %935 = vrot.lane.b32.xlu0 %v922, 96
    %v936 = vpop.permute.xlu0 %935
    %938 = vst.msk [vmem:[#allocation3] sm:$0xff] %vm119, %v936
    %v939 = vld [vmem:[#allocation4] sm:$0xff]
    %941 = vrot.lane.b32.xlu0 %v939, 32
    %v942 = vpop.permute.xlu0 %941
    %v944 = vsel %vm119, %v931, %v942
    %v945 = vpack.c.bf16 %v944, %v944
    %v947 = vsel %vm234, %v945, 0
    %949 = vmatprep.subr.bf16.mxu0 0
    %950 = vmatpush1.bf16.msra.mxu0 0
    %951 = vmatprep.subr.bf16.mxu0 0
    %952 = vmatpush1.bf16.msra.mxu0 0
    %953 = vmatprep.subr.bf16.mxu0 0
    %954 = vmatpush1.bf16.msra.mxu0 0
    %955 = vmatprep.subr.bf16.mxu0 0
    %956 = vmatpush1.bf16.msra.mxu0 0
    %957 = vmatprep.subr.bf16.mxu0 0
    %958 = vmatpush1.bf16.msra.mxu0 %v229
    %959 = vmatprep.subr.bf16.mxu0 0
    %960 = vmatpush1.bf16.msra.mxu0 %v228
    %961 = vmatprep.subr.bf16.mxu0 0
    %962 = vmatpush1.bf16.msra.mxu0 %v227
    %963 = vmatprep.subr.bf16.mxu0 0
    %964 = vmatpush1.bf16.msra.mxu0 %v226
    %965 = vmatprep.subr.bf16.mxu0 0
    %966 = vmatpush2.bf16.msra.mxu0 0
    %967 = vmatprep.subr.bf16.mxu0 0
    %968 = vmatpush2.bf16.msra.mxu0 0
    %969 = vmatprep.subr.bf16.mxu0 0
    %970 = vmatpush2.bf16.msra.mxu0 0
    %971 = vmatprep.subr.bf16.mxu0 0
    %972 = vmatpush2.bf16.msra.mxu0 0
    %973 = vmatprep.subr.bf16.mxu0 0
    %974 = vmatpush2.bf16.msra.mxu0 0
    %975 = vmatprep.subr.bf16.mxu0 0
    %976 = vmatpush2.bf16.msra.mxu0 0
    %977 = vmatprep.subr.bf16.mxu0 0
    %978 = vmatpush2.bf16.msra.mxu0 0
    %979 = vmatprep.subr.bf16.mxu0 0
    %980 = vmatpush2.bf16.msra.mxu0 0
    %981 = vmatprep.mubr.bf16.mxu0 0
    %982 = vmatmul.mubr.bf16.gmra.mxu0 %v947
    %v983 = vpop.f32.mrf.mxu0
    %v984 = vadd.f32 %v102, %v983
    %v985 = vpop.f32.mrf.mxu0
    %v986 = vpop.f32.mrf.mxu0
    %v987 = vpop.f32.mrf.mxu0
    %988 = vdwg.mxu0
    %v989 = vld [vmem:[#allocation5] sm:$0xff]
    %v990 = vxor.u32 %v984, 2147483648
    %v991 = vmul.f32 %v990, 1.442695
    %v992 = vpow.pop %v991
    %v993 = vadd.f32 %v992, 1.0
    %v994 = vrcp.pop %v993
    %v995 = vmul.f32 1.0, %v994
    %v996 = vtanh.pop %v984
    %998 = vrot.lane.b32.xlu0 %v989, 32
    %v999 = vpop.permute.xlu0 %998
    %v1001 = vmul.f32 %v995, %v999
    %1003 = vrot.lane.b32.xlu0 %v996, 32
    %v1004 = vpop.permute.xlu0 %1003
    %v1006 = vmul.f32 %v995, %v1004
    %1008 = vrot.lane.b32.xlu0 %v1006, 32
    %v1009 = vpop.permute.xlu0 %1008
    %v1011 = vadd.f32 %v1001, %v1009
    %v1012 = vtanh.pop %v1011
    %1014 = vrot.lane.b32.xlu0 %v1012, 32
    %v1015 = vpop.permute.xlu0 %1014
    %v1017 = vmul.f32 %v995, %v1015
    %1019 = vrot.lane.b32.xlu0 %v1017, 64
    %v1020 = vpop.permute.xlu0 %1019
    %1022 = vst.msk [vmem:[#allocation4] sm:$0xff] %vm119, %v1020
    %1024 = vrot.lane.b32.xlu0 %v1011, 96
    %v1025 = vpop.permute.xlu0 %1024
    %1027 = vst.msk [vmem:[#allocation5] sm:$0xff] %vm119, %v1025
    %s1028 = scalar_lea.vmem [#allocation14], 32
    %1029 = vst.msk [vmem:[%s1028] sm:$0xff] %vm119, %v1020
    %s1030 = scalar_lea.vmem [#allocation9], 40
    %v1031 = vld [vmem:[%s1030] sm:$0xff]
    %v1032 = vld [vmem:[#allocation2] sm:$0xff]
    %v1033 = vpack.c.bf16 %v1032, %v1032
    %v1035 = vsel %vm119, %v1033, 0
    %1037 = vmatprep.subr.bf16.mxu0 0
    %1038 = vmatpush1.bf16.msra.mxu0 0
    %1039 = vmatprep.subr.bf16.mxu0 0
    %1040 = vmatpush1.bf16.msra.mxu0 0
    %1041 = vmatprep.subr.bf16.mxu0 0
    %1042 = vmatpush1.bf16.msra.mxu0 0
    %1043 = vmatprep.subr.bf16.mxu0 0
    %1044 = vmatpush1.bf16.msra.mxu0 0
    %1045 = vmatprep.subr.bf16.mxu0 0
    %1046 = vmatpush1.bf16.msra.mxu0 0
    %1047 = vmatprep.subr.bf16.mxu0 0
    %1048 = vmatpush1.bf16.msra.mxu0 0
    %1049 = vmatprep.subr.bf16.mxu0 0
    %1050 = vmatpush1.bf16.msra.mxu0 %v116
    %1051 = vmatprep.subr.bf16.mxu0 0
    %1052 = vmatpush1.bf16.msra.mxu0 %v115
    %1053 = vmatprep.subr.bf16.mxu0 0
    %1054 = vmatpush2.bf16.msra.mxu0 0
    %1055 = vmatprep.subr.bf16.mxu0 0
    %1056 = vmatpush2.bf16.msra.mxu0 0
    %1057 = vmatprep.subr.bf16.mxu0 0
    %1058 = vmatpush2.bf16.msra.mxu0 0
    %1059 = vmatprep.subr.bf16.mxu0 0
    %1060 = vmatpush2.bf16.msra.mxu0 0
    %1061 = vmatprep.subr.bf16.mxu0 0
    %1062 = vmatpush2.bf16.msra.mxu0 0
    %1063 = vmatprep.subr.bf16.mxu0 0
    %1064 = vmatpush2.bf16.msra.mxu0 0
    %1065 = vmatprep.subr.bf16.mxu0 0
    %1066 = vmatpush2.bf16.msra.mxu0 0
    %1067 = vmatprep.subr.bf16.mxu0 0
    %1068 = vmatpush2.bf16.msra.mxu0 0
    %1069 = vmatprep.mubr.bf16.mxu0 0
    %1070 = vmatmul.mubr.bf16.gmra.mxu0 %v1035
    %v1071 = vpop.f32.mrf.mxu0
    %v1072 = vadd.f32 0.0, %v1071
    %v1073 = vpop.f32.mrf.mxu0
    %v1074 = vpop.f32.mrf.mxu0
    %v1075 = vpop.f32.mrf.mxu0
    %1076 = vdwg.mxu0
    %v1077 = vadd.f32 %v1031, %v1072
    %v1078 = vld [vmem:[#allocation3] sm:$0xff]
    %v1079 = vxor.u32 %v1077, 2147483648
    %v1080 = vmul.f32 %v1079, 1.442695
    %v1081 = vpow.pop %v1080
    %v1082 = vadd.f32 %v1081, 1.0
    %v1083 = vrcp.pop %v1082
    %v1084 = vmul.f32 1.0, %v1083
    %v1085 = vtanh.pop %v1077
    %1087 = vrot.lane.b32.xlu0 %v1078, 32
    %v1088 = vpop.permute.xlu0 %1087
    %v1090 = vmul.f32 %v1084, %v1088
    %1092 = vrot.lane.b32.xlu0 %v1085, 32
    %v1093 = vpop.permute.xlu0 %1092
    %v1095 = vmul.f32 %v1084, %v1093
    %1097 = vrot.lane.b32.xlu0 %v1095, 32
    %v1098 = vpop.permute.xlu0 %1097
    %v1100 = vadd.f32 %v1090, %v1098
    %v1101 = vtanh.pop %v1100
    %1103 = vrot.lane.b32.xlu0 %v1101, 32
    %v1104 = vpop.permute.xlu0 %1103
    %v1106 = vmul.f32 %v1084, %v1104
    %1108 = vrot.lane.b32.xlu0 %v1106, 64
    %v1109 = vpop.permute.xlu0 %1108
    %1111 = vst.msk [vmem:[#allocation2] sm:$0xff] %vm119, %v1109
    %1113 = vrot.lane.b32.xlu0 %v1100, 96
    %v1114 = vpop.permute.xlu0 %1113
    %1116 = vst.msk [vmem:[#allocation3] sm:$0xff] %vm119, %v1114
    %v1117 = vld [vmem:[#allocation4] sm:$0xff]
    %1119 = vrot.lane.b32.xlu0 %v1117, 32
    %v1120 = vpop.permute.xlu0 %1119
    %v1122 = vsel %vm119, %v1109, %v1120
    %v1123 = vpack.c.bf16 %v1122, %v1122
    %v1125 = vsel %vm234, %v1123, 0
    %1127 = vmatprep.subr.bf16.mxu0 0
    %1128 = vmatpush1.bf16.msra.mxu0 0
    %1129 = vmatprep.subr.bf16.mxu0 0
    %1130 = vmatpush1.bf16.msra.mxu0 0
    %1131 = vmatprep.subr.bf16.mxu0 0
    %1132 = vmatpush1.bf16.msra.mxu0 0
    %1133 = vmatprep.subr.bf16.mxu0 0
    %1134 = vmatpush1.bf16.msra.mxu0 0
    %1135 = vmatprep.subr.bf16.mxu0 0
    %1136 = vmatpush1.bf16.msra.mxu0 %v229
    %1137 = vmatprep.subr.bf16.mxu0 0
    %1138 = vmatpush1.bf16.msra.mxu0 %v228
    %1139 = vmatprep.subr.bf16.mxu0 0
    %1140 = vmatpush1.bf16.msra.mxu0 %v227
    %1141 = vmatprep.subr.bf16.mxu0 0
    %1142 = vmatpush1.bf16.msra.mxu0 %v226
    %1143 = vmatprep.subr.bf16.mxu0 0
    %1144 = vmatpush2.bf16.msra.mxu0 0
    %1145 = vmatprep.subr.bf16.mxu0 0
    %1146 = vmatpush2.bf16.msra.mxu0 0
    %1147 = vmatprep.subr.bf16.mxu0 0
    %1148 = vmatpush2.bf16.msra.mxu0 0
    %1149 = vmatprep.subr.bf16.mxu0 0
    %1150 = vmatpush2.bf16.msra.mxu0 0
    %1151 = vmatprep.subr.bf16.mxu0 0
    %1152 = vmatpush2.bf16.msra.mxu0 0
    %1153 = vmatprep.subr.bf16.mxu0 0
    %1154 = vmatpush2.bf16.msra.mxu0 0
    %1155 = vmatprep.subr.bf16.mxu0 0
    %1156 = vmatpush2.bf16.msra.mxu0 0
    %1157 = vmatprep.subr.bf16.mxu0 0
    %1158 = vmatpush2.bf16.msra.mxu0 0
    %1159 = vmatprep.mubr.bf16.mxu0 0
    %1160 = vmatmul.mubr.bf16.gmra.mxu0 %v1125
    %v1161 = vpop.f32.mrf.mxu0
    %v1162 = vadd.f32 %v102, %v1161
    %v1163 = vpop.f32.mrf.mxu0
    %v1164 = vpop.f32.mrf.mxu0
    %v1165 = vpop.f32.mrf.mxu0
    %1166 = vdwg.mxu0
    %v1167 = vld [vmem:[#allocation5] sm:$0xff]
    %v1168 = vxor.u32 %v1162, 2147483648
    %v1169 = vmul.f32 %v1168, 1.442695
    %v1170 = vpow.pop %v1169
    %v1171 = vadd.f32 %v1170, 1.0
    %v1172 = vrcp.pop %v1171
    %v1173 = vmul.f32 1.0, %v1172
    %v1174 = vtanh.pop %v1162
    %1176 = vrot.lane.b32.xlu0 %v1167, 32
    %v1177 = vpop.permute.xlu0 %1176
    %v1179 = vmul.f32 %v1173, %v1177
    %1181 = vrot.lane.b32.xlu0 %v1174, 32
    %v1182 = vpop.permute.xlu0 %1181
    %v1184 = vmul.f32 %v1173, %v1182
    %1186 = vrot.lane.b32.xlu0 %v1184, 32
    %v1187 = vpop.permute.xlu0 %1186
    %v1189 = vadd.f32 %v1179, %v1187
    %v1190 = vtanh.pop %v1189
    %1192 = vrot.lane.b32.xlu0 %v1190, 32
    %v1193 = vpop.permute.xlu0 %1192
    %v1195 = vmul.f32 %v1173, %v1193
    %1197 = vrot.lane.b32.xlu0 %v1195, 64
    %v1198 = vpop.permute.xlu0 %1197
    %1200 = vst.msk [vmem:[#allocation4] sm:$0xff] %vm119, %v1198
    %1202 = vrot.lane.b32.xlu0 %v1189, 96
    %v1203 = vpop.permute.xlu0 %1202
    %1205 = vst.msk [vmem:[#allocation5] sm:$0xff] %vm119, %v1203
    %s1206 = scalar_lea.vmem [#allocation14], 40
    %1207 = vst.msk [vmem:[%s1206] sm:$0xff] %vm119, %v1198
    %s1208 = scalar_lea.vmem [#allocation9], 48
    %v1209 = vld [vmem:[%s1208] sm:$0xff]
    %v1210 = vld [vmem:[#allocation2] sm:$0xff]
    %v1211 = vpack.c.bf16 %v1210, %v1210
    %v1213 = vsel %vm119, %v1211, 0
    %1215 = vmatprep.subr.bf16.mxu0 0
    %1216 = vmatpush1.bf16.msra.mxu0 0
    %1217 = vmatprep.subr.bf16.mxu0 0
    %1218 = vmatpush1.bf16.msra.mxu0 0
    %1219 = vmatprep.subr.bf16.mxu0 0
    %1220 = vmatpush1.bf16.msra.mxu0 0
    %1221 = vmatprep.subr.bf16.mxu0 0
    %1222 = vmatpush1.bf16.msra.mxu0 0
    %1223 = vmatprep.subr.bf16.mxu0 0
    %1224 = vmatpush1.bf16.msra.mxu0 0
    %1225 = vmatprep.subr.bf16.mxu0 0
    %1226 = vmatpush1.bf16.msra.mxu0 0
    %1227 = vmatprep.subr.bf16.mxu0 0
    %1228 = vmatpush1.bf16.msra.mxu0 %v116
    %1229 = vmatprep.subr.bf16.mxu0 0
    %1230 = vmatpush1.bf16.msra.mxu0 %v115
    %1231 = vmatprep.subr.bf16.mxu0 0
    %1232 = vmatpush2.bf16.msra.mxu0 0
    %1233 = vmatprep.subr.bf16.mxu0 0
    %1234 = vmatpush2.bf16.msra.mxu0 0
    %1235 = vmatprep.subr.bf16.mxu0 0
    %1236 = vmatpush2.bf16.msra.mxu0 0
    %1237 = vmatprep.subr.bf16.mxu0 0
    %1238 = vmatpush2.bf16.msra.mxu0 0
    %1239 = vmatprep.subr.bf16.mxu0 0
    %1240 = vmatpush2.bf16.msra.mxu0 0
    %1241 = vmatprep.subr.bf16.mxu0 0
    %1242 = vmatpush2.bf16.msra.mxu0 0
    %1243 = vmatprep.subr.bf16.mxu0 0
    %1244 = vmatpush2.bf16.msra.mxu0 0
    %1245 = vmatprep.subr.bf16.mxu0 0
    %1246 = vmatpush2.bf16.msra.mxu0 0
    %1247 = vmatprep.mubr.bf16.mxu0 0
    %1248 = vmatmul.mubr.bf16.gmra.mxu0 %v1213
    %v1249 = vpop.f32.mrf.mxu0
    %v1250 = vadd.f32 0.0, %v1249
    %v1251 = vpop.f32.mrf.mxu0
    %v1252 = vpop.f32.mrf.mxu0
    %v1253 = vpop.f32.mrf.mxu0
    %1254 = vdwg.mxu0
    %v1255 = vadd.f32 %v1209, %v1250
    %v1256 = vld [vmem:[#allocation3] sm:$0xff]
    %v1257 = vxor.u32 %v1255, 2147483648
    %v1258 = vmul.f32 %v1257, 1.442695
    %v1259 = vpow.pop %v1258
    %v1260 = vadd.f32 %v1259, 1.0
    %v1261 = vrcp.pop %v1260
    %v1262 = vmul.f32 1.0, %v1261
    %v1263 = vtanh.pop %v1255
    %1265 = vrot.lane.b32.xlu0 %v1256, 32
    %v1266 = vpop.permute.xlu0 %1265
    %v1268 = vmul.f32 %v1262, %v1266
    %1270 = vrot.lane.b32.xlu0 %v1263, 32
    %v1271 = vpop.permute.xlu0 %1270
    %v1273 = vmul.f32 %v1262, %v1271
    %1275 = vrot.lane.b32.xlu0 %v1273, 32
    %v1276 = vpop.permute.xlu0 %1275
    %v1278 = vadd.f32 %v1268, %v1276
    %v1279 = vtanh.pop %v1278
    %1281 = vrot.lane.b32.xlu0 %v1279, 32
    %v1282 = vpop.permute.xlu0 %1281
    %v1284 = vmul.f32 %v1262, %v1282
    %1286 = vrot.lane.b32.xlu0 %v1284, 64
    %v1287 = vpop.permute.xlu0 %1286
    %1289 = vst.msk [vmem:[#allocation2] sm:$0xff] %vm119, %v1287
    %1291 = vrot.lane.b32.xlu0 %v1278, 96
    %v1292 = vpop.permute.xlu0 %1291
    %1294 = vst.msk [vmem:[#allocation3] sm:$0xff] %vm119, %v1292
    %v1295 = vld [vmem:[#allocation4] sm:$0xff]
    %1297 = vrot.lane.b32.xlu0 %v1295, 32
    %v1298 = vpop.permute.xlu0 %1297
    %v1300 = vsel %vm119, %v1287, %v1298
    %v1301 = vpack.c.bf16 %v1300, %v1300
    %v1303 = vsel %vm234, %v1301, 0
    %1305 = vmatprep.subr.bf16.mxu0 0
    %1306 = vmatpush1.bf16.msra.mxu0 0
    %1307 = vmatprep.subr.bf16.mxu0 0
    %1308 = vmatpush1.bf16.msra.mxu0 0
    %1309 = vmatprep.subr.bf16.mxu0 0
    %1310 = vmatpush1.bf16.msra.mxu0 0
    %1311 = vmatprep.subr.bf16.mxu0 0
    %1312 = vmatpush1.bf16.msra.mxu0 0
    %1313 = vmatprep.subr.bf16.mxu0 0
    %1314 = vmatpush1.bf16.msra.mxu0 %v229
    %1315 = vmatprep.subr.bf16.mxu0 0
    %1316 = vmatpush1.bf16.msra.mxu0 %v228
    %1317 = vmatprep.subr.bf16.mxu0 0
    %1318 = vmatpush1.bf16.msra.mxu0 %v227
    %1319 = vmatprep.subr.bf16.mxu0 0
    %1320 = vmatpush1.bf16.msra.mxu0 %v226
    %1321 = vmatprep.subr.bf16.mxu0 0
    %1322 = vmatpush2.bf16.msra.mxu0 0
    %1323 = vmatprep.subr.bf16.mxu0 0
    %1324 = vmatpush2.bf16.msra.mxu0 0
    %1325 = vmatprep.subr.bf16.mxu0 0
    %1326 = vmatpush2.bf16.msra.mxu0 0
    %1327 = vmatprep.subr.bf16.mxu0 0
    %1328 = vmatpush2.bf16.msra.mxu0 0
    %1329 = vmatprep.subr.bf16.mxu0 0
    %1330 = vmatpush2.bf16.msra.mxu0 0
    %1331 = vmatprep.subr.bf16.mxu0 0
    %1332 = vmatpush2.bf16.msra.mxu0 0
    %1333 = vmatprep.subr.bf16.mxu0 0
    %1334 = vmatpush2.bf16.msra.mxu0 0
    %1335 = vmatprep.subr.bf16.mxu0 0
    %1336 = vmatpush2.bf16.msra.mxu0 0
    %1337 = vmatprep.mubr.bf16.mxu0 0
    %1338 = vmatmul.mubr.bf16.gmra.mxu0 %v1303
    %v1339 = vpop.f32.mrf.mxu0
    %v1340 = vadd.f32 %v102, %v1339
    %v1341 = vpop.f32.mrf.mxu0
    %v1342 = vpop.f32.mrf.mxu0
    %v1343 = vpop.f32.mrf.mxu0
    %1344 = vdwg.mxu0
    %v1345 = vld [vmem:[#allocation5] sm:$0xff]
    %v1346 = vxor.u32 %v1340, 2147483648
    %v1347 = vmul.f32 %v1346, 1.442695
    %v1348 = vpow.pop %v1347
    %v1349 = vadd.f32 %v1348, 1.0
    %v1350 = vrcp.pop %v1349
    %v1351 = vmul.f32 1.0, %v1350
    %v1352 = vtanh.pop %v1340
    %1354 = vrot.lane.b32.xlu0 %v1345, 32
    %v1355 = vpop.permute.xlu0 %1354
    %v1357 = vmul.f32 %v1351, %v1355
    %1359 = vrot.lane.b32.xlu0 %v1352, 32
    %v1360 = vpop.permute.xlu0 %1359
    %v1362 = vmul.f32 %v1351, %v1360
    %1364 = vrot.lane.b32.xlu0 %v1362, 32
    %v1365 = vpop.permute.xlu0 %1364
    %v1367 = vadd.f32 %v1357, %v1365
    %v1368 = vtanh.pop %v1367
    %1370 = vrot.lane.b32.xlu0 %v1368, 32
    %v1371 = vpop.permute.xlu0 %1370
    %v1373 = vmul.f32 %v1351, %v1371
    %1375 = vrot.lane.b32.xlu0 %v1373, 64
    %v1376 = vpop.permute.xlu0 %1375
    %1378 = vst.msk [vmem:[#allocation4] sm:$0xff] %vm119, %v1376
    %1380 = vrot.lane.b32.xlu0 %v1367, 96
    %v1381 = vpop.permute.xlu0 %1380
    %1383 = vst.msk [vmem:[#allocation5] sm:$0xff] %vm119, %v1381
    %s1384 = scalar_lea.vmem [#allocation14], 48
    %1385 = vst.msk [vmem:[%s1384] sm:$0xff] %vm119, %v1376
    %s1386 = scalar_lea.vmem [#allocation9], 56
    %v1387 = vld [vmem:[%s1386] sm:$0xff]
    %v1388 = vld [vmem:[#allocation2] sm:$0xff]
    %v1389 = vpack.c.bf16 %v1388, %v1388
    %v1391 = vsel %vm119, %v1389, 0
    %1393 = vmatprep.subr.bf16.mxu0 0
    %1394 = vmatpush1.bf16.msra.mxu0 0
    %1395 = vmatprep.subr.bf16.mxu0 0
    %1396 = vmatpush1.bf16.msra.mxu0 0
    %1397 = vmatprep.subr.bf16.mxu0 0
    %1398 = vmatpush1.bf16.msra.mxu0 0
    %1399 = vmatprep.subr.bf16.mxu0 0
    %1400 = vmatpush1.bf16.msra.mxu0 0
    %1401 = vmatprep.subr.bf16.mxu0 0
    %1402 = vmatpush1.bf16.msra.mxu0 0
    %1403 = vmatprep.subr.bf16.mxu0 0
    %1404 = vmatpush1.bf16.msra.mxu0 0
    %1405 = vmatprep.subr.bf16.mxu0 0
    %1406 = vmatpush1.bf16.msra.mxu0 %v116
    %1407 = vmatprep.subr.bf16.mxu0 0
    %1408 = vmatpush1.bf16.msra.mxu0 %v115
    %1409 = vmatprep.subr.bf16.mxu0 0
    %1410 = vmatpush2.bf16.msra.mxu0 0
    %1411 = vmatprep.subr.bf16.mxu0 0
    %1412 = vmatpush2.bf16.msra.mxu0 0
    %1413 = vmatprep.subr.bf16.mxu0 0
    %1414 = vmatpush2.bf16.msra.mxu0 0
    %1415 = vmatprep.subr.bf16.mxu0 0
    %1416 = vmatpush2.bf16.msra.mxu0 0
    %1417 = vmatprep.subr.bf16.mxu0 0
    %1418 = vmatpush2.bf16.msra.mxu0 0
    %1419 = vmatprep.subr.bf16.mxu0 0
    %1420 = vmatpush2.bf16.msra.mxu0 0
    %1421 = vmatprep.subr.bf16.mxu0 0
    %1422 = vmatpush2.bf16.msra.mxu0 0
    %1423 = vmatprep.subr.bf16.mxu0 0
    %1424 = vmatpush2.bf16.msra.mxu0 0
    %1425 = vmatprep.mubr.bf16.mxu0 0
    %1426 = vmatmul.mubr.bf16.gmra.mxu0 %v1391
    %v1427 = vpop.f32.mrf.mxu0
    %v1428 = vadd.f32 0.0, %v1427
    %v1429 = vpop.f32.mrf.mxu0
    %v1430 = vpop.f32.mrf.mxu0
    %v1431 = vpop.f32.mrf.mxu0
    %1432 = vdwg.mxu0
    %v1433 = vadd.f32 %v1387, %v1428
    %v1434 = vld [vmem:[#allocation3] sm:$0xff]
    %v1435 = vxor.u32 %v1433, 2147483648
    %v1436 = vmul.f32 %v1435, 1.442695
    %v1437 = vpow.pop %v1436
    %v1438 = vadd.f32 %v1437, 1.0
    %v1439 = vrcp.pop %v1438
    %v1440 = vmul.f32 1.0, %v1439
    %v1441 = vtanh.pop %v1433
    %1443 = vrot.lane.b32.xlu0 %v1434, 32
    %v1444 = vpop.permute.xlu0 %1443
    %v1446 = vmul.f32 %v1440, %v1444
    %1448 = vrot.lane.b32.xlu0 %v1441, 32
    %v1449 = vpop.permute.xlu0 %1448
    %v1451 = vmul.f32 %v1440, %v1449
    %1453 = vrot.lane.b32.xlu0 %v1451, 32
    %v1454 = vpop.permute.xlu0 %1453
    %v1456 = vadd.f32 %v1446, %v1454
    %v1457 = vtanh.pop %v1456
    %1459 = vrot.lane.b32.xlu0 %v1457, 32
    %v1460 = vpop.permute.xlu0 %1459
    %v1462 = vmul.f32 %v1440, %v1460
    %1464 = vrot.lane.b32.xlu0 %v1462, 64
    %v1465 = vpop.permute.xlu0 %1464
    %1467 = vst.msk [vmem:[#allocation2] sm:$0xff] %vm119, %v1465
    %1469 = vrot.lane.b32.xlu0 %v1456, 96
    %v1470 = vpop.permute.xlu0 %1469
    %1472 = vst.msk [vmem:[#allocation3] sm:$0xff] %vm119, %v1470
    %v1473 = vld [vmem:[#allocation4] sm:$0xff]
    %1475 = vrot.lane.b32.xlu0 %v1473, 32
    %v1476 = vpop.permute.xlu0 %1475
    %v1478 = vsel %vm119, %v1465, %v1476
    %v1479 = vpack.c.bf16 %v1478, %v1478
    %v1481 = vsel %vm234, %v1479, 0
    %1483 = vmatprep.subr.bf16.mxu0 0
    %1484 = vmatpush1.bf16.msra.mxu0 0
    %1485 = vmatprep.subr.bf16.mxu0 0
    %1486 = vmatpush1.bf16.msra.mxu0 0
    %1487 = vmatprep.subr.bf16.mxu0 0
    %1488 = vmatpush1.bf16.msra.mxu0 0
    %1489 = vmatprep.subr.bf16.mxu0 0
    %1490 = vmatpush1.bf16.msra.mxu0 0
    %1491 = vmatprep.subr.bf16.mxu0 0
    %1492 = vmatpush1.bf16.msra.mxu0 %v229
    %1493 = vmatprep.subr.bf16.mxu0 0
    %1494 = vmatpush1.bf16.msra.mxu0 %v228
    %1495 = vmatprep.subr.bf16.mxu0 0
    %1496 = vmatpush1.bf16.msra.mxu0 %v227
    %1497 = vmatprep.subr.bf16.mxu0 0
    %1498 = vmatpush1.bf16.msra.mxu0 %v226
    %1499 = vmatprep.subr.bf16.mxu0 0
    %1500 = vmatpush2.bf16.msra.mxu0 0
    %1501 = vmatprep.subr.bf16.mxu0 0
    %1502 = vmatpush2.bf16.msra.mxu0 0
    %1503 = vmatprep.subr.bf16.mxu0 0
    %1504 = vmatpush2.bf16.msra.mxu0 0
    %1505 = vmatprep.subr.bf16.mxu0 0
    %1506 = vmatpush2.bf16.msra.mxu0 0
    %1507 = vmatprep.subr.bf16.mxu0 0
    %1508 = vmatpush2.bf16.msra.mxu0 0
    %1509 = vmatprep.subr.bf16.mxu0 0
    %1510 = vmatpush2.bf16.msra.mxu0 0
    %1511 = vmatprep.subr.bf16.mxu0 0
    %1512 = vmatpush2.bf16.msra.mxu0 0
    %1513 = vmatprep.subr.bf16.mxu0 0
    %1514 = vmatpush2.bf16.msra.mxu0 0
    %1515 = vmatprep.mubr.bf16.mxu0 0
    %1516 = vmatmul.mubr.bf16.gmra.mxu0 %v1481
    %v1517 = vpop.f32.mrf.mxu0
    %v1518 = vadd.f32 %v102, %v1517
    %v1519 = vpop.f32.mrf.mxu0
    %v1520 = vpop.f32.mrf.mxu0
    %v1521 = vpop.f32.mrf.mxu0
    %1522 = vdwg.mxu0
    %v1523 = vld [vmem:[#allocation5] sm:$0xff]
    %v1524 = vxor.u32 %v1518, 2147483648
    %v1525 = vmul.f32 %v1524, 1.442695
    %v1526 = vpow.pop %v1525
    %v1527 = vadd.f32 %v1526, 1.0
    %v1528 = vrcp.pop %v1527
    %v1529 = vmul.f32 1.0, %v1528
    %v1530 = vtanh.pop %v1518
    %1532 = vrot.lane.b32.xlu0 %v1523, 32
    %v1533 = vpop.permute.xlu0 %1532
    %v1535 = vmul.f32 %v1529, %v1533
    %1537 = vrot.lane.b32.xlu0 %v1530, 32
    %v1538 = vpop.permute.xlu0 %1537
    %v1540 = vmul.f32 %v1529, %v1538
    %1542 = vrot.lane.b32.xlu0 %v1540, 32
    %v1543 = vpop.permute.xlu0 %1542
    %v1545 = vadd.f32 %v1535, %v1543
    %v1546 = vtanh.pop %v1545
    %1548 = vrot.lane.b32.xlu0 %v1546, 32
    %v1549 = vpop.permute.xlu0 %1548
    %v1551 = vmul.f32 %v1529, %v1549
    %1553 = vrot.lane.b32.xlu0 %v1551, 64
    %v1554 = vpop.permute.xlu0 %1553
    %1556 = vst.msk [vmem:[#allocation4] sm:$0xff] %vm119, %v1554
    %1558 = vrot.lane.b32.xlu0 %v1545, 96
    %v1559 = vpop.permute.xlu0 %1558
    %1561 = vst.msk [vmem:[#allocation5] sm:$0xff] %vm119, %v1559
    %s1562 = scalar_lea.vmem [#allocation14], 56
    %1563 = vst.msk [vmem:[%s1562] sm:$0xff] %vm119, %v1554
    // Predicated region
    $region42: #{tpu_custom_call.1} parent=1 // pred_check
      _
    $region43: #{tpu_custom_call.1} parent=1 // pred_check_branch
      %1565 = sbr.rel (0) target = $region45
    $region44: #{tpu_custom_call.1} parent=1 // pred_region
      %s1567 = ssub.s32 1024, 1024
      %1568 = vsyncadd [#allocation8], %s1567
      %s1569 = sshll.u32 [#allocation14], 4
      %s1570 = int_to_ptr.vmem [resolvable:$true] %s1569
      %1575 = dma.vmem_to_hbm [thread:$0]  %s1570, 1024, %s5, [#allocation8], 128, 128, 8
    $region45: #{tpu_custom_call.1} parent=1 // pred_fallthru
      _
    // Predicated region
    $region46: #{tpu_custom_call.1} parent=1 // pred_check
      _
    $region47: #{tpu_custom_call.1} parent=1 // pred_check_branch
      %1577 = sbr.rel (0) target = $region49
    $region48: #{tpu_custom_call.1} parent=1 // pred_region
      %1578 = dma.done [#allocation8], 1024
    $region49: #{tpu_custom_call.1} parent=1 // pred_fallthru
      _
    %1579 = vsyncpa [#allocation7], 1
    %1580 = vsyncpa [#allocation10], 1
    %1581 = vsyncpa [#allocation13], 1
    %1582 = vsyncpa [#allocation8], 1

</llo_original>
